<compile_context>
chip_gen: v7x
topology: tpu7x:2x2x1
jax: 0.10.0
libtpu: 0.0.40
codegen_flags: <defaults>
</compile_context>

<pallas_src>
import functools
import math

import numpy as np

import jax
import jax.numpy as jnp
from jax.experimental import pallas as pl
from jax.experimental.pallas import tpu as pltpu


# ------------------------------ small helpers ------------------------------

def _round_up(x, m):
    return (x + m - 1) // m * m


def _nbytes(shape, dtype):
    return math.prod(shape) * jnp.dtype(dtype).itemsize


def _vmem_limit(block_bytes):
    # double-buffered blocks + headroom; clamp into [32 MiB, 64 MiB] so the
    # value is above the v5e/v6e scoped defaults but never above v7x physical.
    return int(min(64 * 1024 * 1024,
                   max(32 * 1024 * 1024, 2 * block_bytes + (2 << 20))))


def _row_tile(m):
    """Largest row tile (multiple of 16, bf16 sublane packing) that still gives
    >=2 grid programs (so both v7x TensorCores get work).  `m` is pre-padded to
    a multiple of 16 by the callers, so there is no giant single-tile fallback."""
    for c in (512, 256, 128, 64, 32, 16):
        if m % c == 0 and m // c >= 2:
            return c
    return m


_ERF_P = 0.3275911
_ERF_A = (0.254829592, -0.284496736, 1.421413741, -1.453152027, 1.061405429)


def _erf(x):
    # Abramowitz & Stegun 7.1.26 (|err| < 1.5e-7); only exp/mul/add/select, all
    # with guaranteed Mosaic lowerings (avoids relying on a lax.erf lowering).
    ax = jnp.abs(x)
    t = 1.0 / (1.0 + _ERF_P * ax)
    a1, a2, a3, a4, a5 = _ERF_A
    poly = ((((a5 * t + a4) * t + a3) * t + a2) * t + a1) * t
    y = 1.0 - poly * jnp.exp(-ax * ax)
    return jnp.where(x >= 0.0, y, -y)


def _gelu(x):
    # exact (erf) GELU, matching torchvision ConvNeXt's nn.GELU
    return 0.5 * x * (1.0 + _erf(x * 0.7071067811865475))


def _sigmoid(x):
    # exact sigmoid via EUP tanh (guaranteed Pallas/TPU lowering)
    return 0.5 * (jnp.tanh(0.5 * x) + 1.0)


def _finish(y, b, activation, ln, eps):
    """Matmul epilogue on the f32 tile: +bias, optional GELU, optional LayerNorm."""
    y = y + b
    if activation == "gelu":
        y = _gelu(y)
    if ln is not None:
        g, be = ln
        mu = jnp.mean(y, axis=-1, keepdims=True)
        var = jnp.mean((y - mu) * (y - mu), axis=-1, keepdims=True)
        y = (y - mu) * jax.lax.rsqrt(var + eps) * g + be
    return y


# --------------------------- tiled dense (matmul) ---------------------------

def _dense1_kernel(x_ref, w_ref, b_ref, *rest, activation, has_ln, eps):
    # fast path: single K step -> no accumulator scratch, no init/flush phases
    if has_ln:
        g_ref, be_ref, o_ref = rest
        ln = (g_ref[...], be_ref[...])
    else:
        (o_ref,) = rest
        ln = None
    y = jnp.dot(x_ref[...], w_ref[...], preferred_element_type=jnp.float32)
    o_ref[...] = _finish(y, b_ref[...], activation, ln, eps).astype(o_ref.dtype)


def _dense_kernel(x_ref, w_ref, b_ref, *rest, activation, has_ln, eps, n_k):
    if has_ln:
        g_ref, be_ref, o_ref, acc_ref = rest
    else:
        o_ref, acc_ref = rest
        g_ref = be_ref = None
    k = pl.program_id(2)

    @pl.when(k == 0)
    def _():
        acc_ref[...] = jnp.zeros_like(acc_ref)

    acc_ref[...] += jnp.dot(x_ref[...], w_ref[...],
                            preferred_element_type=jnp.float32)

    @pl.when(k == n_k - 1)
    def _():
        ln = (g_ref[...], be_ref[...]) if has_ln else None
        y = _finish(acc_ref[...], b_ref[...], activation, ln, eps)
        o_ref[...] = y.astype(o_ref.dtype)


def dense(x, w, b, *, activation=None, ln=None, eps=1e-6, out_dtype=None):
    """y = act(x @ w + b) [optionally followed by LayerNorm over N].

    x: (M, K), w: (K, N), b: (N,).  bf16 MXU operands, f32 accumulation."""
    M, K = x.shape
    _, N = w.shape
    out_dtype = out_dtype if out_dtype is not None else x.dtype

    Mp = max(16, _round_up(M, 16))
    if Mp != M:
        x = jnp.pad(x, ((0, Mp - M), (0, 0)))
    tm = _row_tile(Mp)
    if ln is not None:
        tn = N                                   # LN needs the full row present
    elif N % 256 == 0:
        tn = 256                                 # 2x256 MXU-friendly, lane-dense
    elif N % 128 == 0:
        tn = 128
    else:
        tn = N
    tk = 512 if K % 512 == 0 else (256 if K % 256 == 0 else K)
    n_k = K // tk
    has_ln = ln is not None

    args = [x, w, b.reshape(1, N)]
    if has_ln:
        args += [ln[0].reshape(1, N), ln[1].reshape(1, N)]

    blk_bytes = (_nbytes((tm, tk), x.dtype) + _nbytes((tk, tn), w.dtype)
                 + _nbytes((tm, tn), out_dtype) + _nbytes((tm, tn), jnp.float32))

    if n_k == 1:
        in_specs = [pl.BlockSpec((tm, tk), lambda i, j: (i, 0)),
                    pl.BlockSpec((tk, tn), lambda i, j: (0, j)),
                    pl.BlockSpec((1, tn), lambda i, j: (0, j))]
        if has_ln:
            in_specs += [pl.BlockSpec((1, tn), lambda i, j: (0, j))] * 2
        out = pl.pallas_call(
            functools.partial(_dense1_kernel, activation=activation,
                              has_ln=has_ln, eps=eps),
            out_shape=jax.ShapeDtypeStruct((Mp, N), out_dtype),
            grid=(Mp // tm, N // tn),
            in_specs=in_specs,
            out_specs=pl.BlockSpec((tm, tn), lambda i, j: (i, j)),
            compiler_params=pltpu.CompilerParams(
                dimension_semantics=("parallel", "parallel"),
                vmem_limit_bytes=_vmem_limit(blk_bytes)),
        )(*args)
    else:
        in_specs = [pl.BlockSpec((tm, tk), lambda i, j, k: (i, k)),
                    pl.BlockSpec((tk, tn), lambda i, j, k: (k, j)),
                    pl.BlockSpec((1, tn), lambda i, j, k: (0, j))]
        if has_ln:
            in_specs += [pl.BlockSpec((1, tn), lambda i, j, k: (0, j))] * 2
        out = pl.pallas_call(
            functools.partial(_dense_kernel, activation=activation,
                              has_ln=has_ln, eps=eps, n_k=n_k),
            out_shape=jax.ShapeDtypeStruct((Mp, N), out_dtype),
            grid=(Mp // tm, N // tn, n_k),
            in_specs=in_specs,
            out_specs=pl.BlockSpec((tm, tn), lambda i, j, k: (i, j)),
            scratch_shapes=[pltpu.VMEM((tm, tn), jnp.float32)],
            compiler_params=pltpu.CompilerParams(
                dimension_semantics=("parallel", "parallel", "arbitrary"),
                vmem_limit_bytes=_vmem_limit(blk_bytes)),
        )(*args)
    return out if Mp == M else out[:M]


# ------------------------- depthwise 7x7 convolution -------------------------
# Works on the flat (H*W, C) frame.  Each of the 49 taps is a single
# pltpu.roll of the whole frame along the sublane axis (XLU) plus a
# precomputed zero-padding border mask -> no HBM pad, no misaligned slices.

_DW_ROLL_MODE = None        # True: pltpu.roll (XLU path); False: jnp.roll fallback


def _dwconv_kernel(x_ref, m_ref, w_ref, b_ref, o_ref, *, HW, W, use_xlu):
    x = x_ref[0].astype(jnp.float32)                     # (HW, C)
    acc = jnp.zeros_like(x)
    for dy in range(7):
        for dx in range(7):
            tap = dy * 7 + dx
            # out[h*W+w] needs x[(h+dy-3)*W + (w+dx-3)]  (jnp.roll convention)
            shift = (-((dy - 3) * W + (dx - 3))) % HW
            if shift == 0:
                shifted = x
            elif use_xlu:
                shifted = pltpu.roll(x, shift, 0)        # sublane rotate (XLU)
            else:
                shifted = jnp.roll(x, shift, axis=0)     # slice/concat fallback
            ktap = w_ref[tap:tap + 1, :]                 # (1, C)
            if dy == 3 and dx == 3:                      # centre tap: all valid
                acc = acc + shifted * ktap
            else:
                acc = acc + shifted * m_ref[:, tap:tap + 1] * ktap
    o_ref[0] = (acc + b_ref[...]).astype(o_ref.dtype)


@functools.lru_cache(maxsize=None)
def _dw_masks_np(H, W):
    m = np.arange(H * W)
    h, w = m // W, m % W
    cols = []
    for dy in range(7):
        for dx in range(7):
            oy, ox = dy - 3, dx - 3
            cols.append(((h + oy >= 0) & (h + oy < H) &
                         (w + ox >= 0) & (w + ox < W)).astype(np.float32))
    return np.stack(cols, axis=1)                        # (H*W, 49)


def _dw_masks(H, W):
    return jnp.asarray(_dw_masks_np(H, W))


def _dwconv_call(x, masks, w, b, *, W, use_xlu):
    BT, HW, C = x.shape
    blk = (_nbytes((1, HW, C), x.dtype) + _nbytes((HW, 49), jnp.float32)
           + _nbytes((49, C), jnp.float32) + 2 * _nbytes((HW, C), jnp.float32))
    return pl.pallas_call(
        functools.partial(_dwconv_kernel, HW=HW, W=W, use_xlu=use_xlu),
        out_shape=jax.ShapeDtypeStruct((BT, HW, C), x.dtype),
        grid=(BT,),
        in_specs=[pl.BlockSpec((1, HW, C), lambda i: (i, 0, 0)),
                  pl.BlockSpec((HW, 49), lambda i: (0, 0)),
                  pl.BlockSpec((49, C), lambda i: (0, 0)),
                  pl.BlockSpec((1, C), lambda i: (0, 0))],
        out_specs=pl.BlockSpec((1, HW, C), lambda i: (i, 0, 0)),
        compiler_params=pltpu.CompilerParams(
            dimension_semantics=("parallel",),
            vmem_limit_bytes=_vmem_limit(blk)),
    )(x, masks, w, b.reshape(1, -1))


def dwconv7x7(x, w, b, masks, *, W):
    """Depthwise 7x7 / stride 1 / pad 3.  x: (BT, H*W, C) channels-last."""
    # TODO(synk): for very large frames, split H into halo'd row slabs via a
    # second grid axis (manual DMA) instead of one full frame per program.
    global _DW_ROLL_MODE
    if _DW_ROLL_MODE is None:
        try:
            out = _dwconv_call(x, masks, w, b, W=W, use_xlu=True)
            jax.block_until_ready(out)
            _DW_ROLL_MODE = True
            return out
        except Exception:
            _DW_ROLL_MODE = False   # pltpu.roll path rejected -> slice fallback
    return _dwconv_call(x, masks, w, b, W=W, use_xlu=_DW_ROLL_MODE)


# ---------- fused ConvNeXt block tail: LN + MLP + layer_scale + residual -----
# Grid = (row tiles, hidden chunks).  The hidden (4C) dim is blocked through
# the grid so w1/w2 VMEM blocks stay small at production widths; the LN'd
# input and the f32 accumulator live in VMEM scratch across hidden chunks.

def _cnblock_kernel(*refs, n_hc, eps, post_ln):
    if post_ln:
        (x_ref, r_ref, g_ref, b_ref, w1_ref, b1_ref, w2_ref, b2_ref, gam_ref,
         pg_ref, pb_ref, o_ref, xn_ref, acc_ref) = refs
    else:
        (x_ref, r_ref, g_ref, b_ref, w1_ref, b1_ref, w2_ref, b2_ref, gam_ref,
         o_ref, xn_ref, acc_ref) = refs
        pg_ref = pb_ref = None

    j = pl.program_id(1)

    @pl.when(j == 0)
    def _():
        xv = x_ref[...].astype(jnp.float32)
        mu = jnp.mean(xv, axis=-1, keepdims=True)
        var = jnp.mean((xv - mu) * (xv - mu), axis=-1, keepdims=True)
        xn_ref[...] = ((xv - mu) * jax.lax.rsqrt(var + eps) * g_ref[...]
                       + b_ref[...])
        acc_ref[...] = jnp.zeros_like(acc_ref)

    xn = xn_ref[...]
    h = jnp.dot(xn.astype(w1_ref.dtype), w1_ref[...],
                preferred_element_type=jnp.float32) + b1_ref[...]
    h = _gelu(h)
    acc_ref[...] += jnp.dot(h.astype(w2_ref.dtype), w2_ref[...],
                            preferred_element_type=jnp.float32)

    @pl.when(j == n_hc - 1)
    def _():
        y = acc_ref[...] + b2_ref[...]
        # layer_scale * y + residual  (stochastic depth == identity in eval)
        out = r_ref[...].astype(jnp.float32) + gam_ref[...] * y
        if post_ln:          # fused pre-downsample LayerNorm (stage transition)
            mu = jnp.mean(out, axis=-1, keepdims=True)
            var = jnp.mean((out - mu) * (out - mu), axis=-1, keepdims=True)
            out = (out - mu) * jax.lax.rsqrt(var + eps) * pg_ref[...] + pb_ref[...]
        o_ref[...] = out.astype(o_ref.dtype)


def cnblock_tail(x, residual, ln_g, ln_b, w1, b1, w2, b2, gamma, *,
                 post_ln=None, eps=1e-6):
    M, C = x.shape
    Ci = w1.shape[1]
    Mp = max(16, _round_up(M, 16))
    if Mp != M:
        x = jnp.pad(x, ((0, Mp - M), (0, 0)))
        residual = jnp.pad(residual, ((0, Mp - M), (0, 0)))
    tm = _row_tile(Mp)
    hc = 512 if Ci % 512 == 0 else (256 if Ci % 256 == 0 else Ci)
    n_hc = Ci // hc
    has_pln = post_ln is not None
    v = lambda t, n: t.reshape(1, n)

    args = [x, residual, v(ln_g, C), v(ln_b, C), w1, v(b1, Ci), w2, v(b2, C),
            v(gamma, C)]
    in_specs = [
        pl.BlockSpec((tm, C), lambda i, j: (i, 0)),
        pl.BlockSpec((tm, C), lambda i, j: (i, 0)),
        pl.BlockSpec((1, C), lambda i, j: (0, 0)),
        pl.BlockSpec((1, C), lambda i, j: (0, 0)),
        pl.BlockSpec((C, hc), lambda i, j: (0, j)),
        pl.BlockSpec((1, hc), lambda i, j: (0, j)),
        pl.BlockSpec((hc, C), lambda i, j: (j, 0)),
        pl.BlockSpec((1, C), lambda i, j: (0, 0)),
        pl.BlockSpec((1, C), lambda i, j: (0, 0)),
    ]
    if has_pln:
        args += [v(post_ln[0], C), v(post_ln[1], C)]
        in_specs += [pl.BlockSpec((1, C), lambda i, j: (0, 0))] * 2

    blk_bytes = (2 * _nbytes((tm, C), x.dtype) + _nbytes((C, hc), w1.dtype)
                 + _nbytes((hc, C), w2.dtype) + 3 * _nbytes((tm, C), jnp.float32))
    out = pl.pallas_call(
        functools.partial(_cnblock_kernel, n_hc=n_hc, eps=eps, post_ln=has_pln),
        out_shape=jax.ShapeDtypeStruct((Mp, C), x.dtype),
        grid=(Mp // tm, n_hc),
        in_specs=in_specs,
        out_specs=pl.BlockSpec((tm, C), lambda i, j: (i, 0)),
        scratch_shapes=[pltpu.VMEM((tm, C), jnp.float32),     # LN'd input
                        pltpu.VMEM((tm, C), jnp.float32)],    # f32 accumulator
        input_output_aliases={1: 0},      # residual buffer re-used as output
        compiler_params=pltpu.CompilerParams(
            dimension_semantics=("parallel", "arbitrary"),
            vmem_limit_bytes=_vmem_limit(blk_bytes)),
    )(*args)
    return out if Mp == M else out[:M]


# ------------- global average pool fused with LSTM input projection ----------

def _pool_proj_kernel(x_ref, w_ref, b_ref, o_ref):
    x = x_ref[...].astype(jnp.float32)                   # (tb, HW, C)
    pooled = jnp.mean(x, axis=1)                         # (tb, C)
    g = jnp.dot(pooled.astype(w_ref.dtype), w_ref[...],
                preferred_element_type=jnp.float32) + b_ref[...]
    o_ref[...] = g.astype(o_ref.dtype)


def pool_project(x, w_ih, b_ih):
    """x: (BT, H*W, C) -> mean over H*W, then @ W_ih + b_ih -> (BT, 4H) f32."""
    BT, HW, C = x.shape
    G = w_ih.shape[1]
    tb = BT if (BT <= 8 or BT % 8 != 0) else 8
    blk = (_nbytes((tb, HW, C), x.dtype) + _nbytes((C, G), w_ih.dtype)
           + _nbytes((tb, G), jnp.float32))
    return pl.pallas_call(
        _pool_proj_kernel,
        out_shape=jax.ShapeDtypeStruct((BT, G), jnp.float32),
        grid=(BT // tb,),
        in_specs=[pl.BlockSpec((tb, HW, C), lambda i: (i, 0, 0)),
                  pl.BlockSpec((C, G), lambda i: (0, 0)),
                  pl.BlockSpec((1, G), lambda i: (0, 0))],
        out_specs=pl.BlockSpec((tb, G), lambda i: (i, 0)),
        compiler_params=pltpu.CompilerParams(
            dimension_semantics=("parallel",),
            vmem_limit_bytes=_vmem_limit(blk)),
    )(x, w_ih, b_ih.reshape(1, G))


# ----------------------------- LSTM (last step) ------------------------------

def _lstm_kernel(gx_ref, whh_ref, bhh_ref, o_ref, *, T, H, unroll):
    whh = whh_ref[...]                                    # (H, 4H) f32
    bhh = bhh_ref[...]                                    # (1, 4H) f32
    Bp = o_ref.shape[0]

    def step(t, carry):
        h, c = carry
        g = gx_ref[t] + jnp.dot(h, whh, preferred_element_type=jnp.float32) + bhh
        i = _sigmoid(g[:, 0 * H:1 * H])                   # PyTorch gate order
        f = _sigmoid(g[:, 1 * H:2 * H])
        gg = jnp.tanh(g[:, 2 * H:3 * H])
        o = _sigmoid(g[:, 3 * H:4 * H])
        c = f * c + i * gg
        h = o * jnp.tanh(c)
        return (h, c)

    h0 = jnp.zeros((Bp, H), jnp.float32)
    c0 = jnp.zeros((Bp, H), jnp.float32)
    h, _ = jax.lax.fori_loop(0, T, step, (h0, c0), unroll=unroll)
    o_ref[...] = h


def lstm_last(gates_x, w_hh, b_hh, *, hidden):
    """gates_x: (T, B, 4H) precomputed x_t @ W_ih + b_ih; returns last h (B, H)."""
    # TODO(synk): for long sequences, stream gates_x through a grid axis with
    # h/c in VMEM scratch instead of holding the whole (T, B, 4H) block.
    T, B, G = gates_x.shape
    Bp = _round_up(max(B, 8), 8)
    if Bp != B:
        gates_x = jnp.pad(gates_x, ((0, 0), (0, Bp - B), (0, 0)))
    blk = _nbytes((T, Bp, G), jnp.float32) + _nbytes((hidden, G), jnp.float32)
    out = pl.pallas_call(
        functools.partial(_lstm_kernel, T=T, H=hidden, unroll=(T <= 16)),
        out_shape=jax.ShapeDtypeStruct((Bp, hidden), jnp.float32),
        grid=(1,),
        in_specs=[pl.BlockSpec((T, Bp, G), lambda i: (0, 0, 0)),
                  pl.BlockSpec((hidden, G), lambda i: (0, 0)),
                  pl.BlockSpec((1, G), lambda i: (0, 0))],
        out_specs=pl.BlockSpec((Bp, hidden), lambda i: (0, 0)),
        compiler_params=pltpu.CompilerParams(
            dimension_semantics=("arbitrary",),
            vmem_limit_bytes=_vmem_limit(blk)),
    )(gates_x, w_hh, b_hh.reshape(1, G))
    return out[:B]


# --------------------------- parameter construction ---------------------------

def init_params(key, *, in_ch, dims, depths, lstm_hidden, layer_scale=1e-6):
    keys = iter(jax.random.split(key, 256))
    bf, f32 = jnp.bfloat16, jnp.float32

    def nrm(shape, dtype):
        return (0.02 * jax.random.normal(next(keys), shape, f32)).astype(dtype)

    p = {
        "stem_w": nrm((4 * 4 * in_ch, dims[0]), bf),
        "stem_b": jnp.zeros((dims[0],), f32),
        "stem_ln_g": jnp.ones((dims[0],), f32),
        "stem_ln_b": jnp.zeros((dims[0],), f32),
        "stages": [], "downsample": [],
    }
    for si, depth in enumerate(depths):
        c = dims[si]
        blocks = []
        for _ in range(depth):
            blocks.append({
                "dw_w": nrm((49, c), f32),
                "dw_b": jnp.zeros((c,), f32),
                "ln_g": jnp.ones((c,), f32),
                "ln_b": jnp.zeros((c,), f32),
                "w1": nrm((c, 4 * c), bf),
                "b1": jnp.zeros((4 * c,), f32),
                "w2": nrm((4 * c, c), bf),
                "b2": jnp.zeros((c,), f32),
                "gamma": jnp.full((c,), layer_scale, f32),
            })
        p["stages"].append(blocks)
        if si < len(dims) - 1:
            p["downsample"].append({
                "ln_g": jnp.ones((c,), f32),
                "ln_b": jnp.zeros((c,), f32),
                "w": nrm((2 * 2 * c, dims[si + 1]), bf),
                "b": jnp.zeros((dims[si + 1],), f32),
            })
    G = 4 * lstm_hidden
    # NOTE: PyTorch nn.LSTM stores weight_ih/(weight_hh) as (4H, in)/(4H, H)
    # with gate order (i, f, g, o); these synthetic weights are created already
    # transposed to (in, 4H)/(H, 4H) in the same gate order.
    p["lstm_w_ih"] = nrm((dims[-1], G), bf)
    p["lstm_b_ih"] = jnp.zeros((G,), f32)
    p["lstm_w_hh"] = nrm((lstm_hidden, G), f32)
    p["lstm_b_hh"] = jnp.zeros((G,), f32)
    return p


# --------------------------------- forward ----------------------------------

def _patchify(x_nhwc, p):
    """(BT, H, W, C) -> ((BT*H/p*W/p, p*p*C), H/p, W/p): stride-p patch conv as matmul."""
    BT, H, W, C = x_nhwc.shape
    x = x_nhwc.reshape(BT, H // p, p, W // p, p, C)
    x = x.transpose(0, 1, 3, 2, 4, 5)
    return x.reshape(BT * (H // p) * (W // p), p * p * C), H // p, W // p


def convnext_lstm_forward(params, x, *, dims, depths, lstm_hidden):
    """Equivalent of ConvNextWithLSTM.forward: x (B, C, T, H, W) -> (B, H_lstm)."""
    B, C_in, T, H, W = x.shape
    BT = B * T
    # 'B C T H W -> B T C H W' + TimeDistributed flatten, NHWC for lane-density
    frames = x.transpose(0, 2, 3, 4, 1).reshape(BT, H, W, C_in)

    # stem: 4x4 / stride-4 patchify conv + LayerNorm fused into one matmul
    xp, ch, cw = _patchify(frames, 4)
    feat = dense(xp.astype(jnp.bfloat16), params["stem_w"], params["stem_b"],
                 ln=(params["stem_ln_g"], params["stem_ln_b"]),
                 out_dtype=jnp.bfloat16)                       # (BT*ch*cw, C0)

    for si, depth in enumerate(depths):
        c = dims[si]
        hw = ch * cw
        masks = _dw_masks(ch, cw)
        last_stage = si == len(dims) - 1
        for bi in range(depth):
            blk = params["stages"][si][bi]
            dw = dwconv7x7(feat.reshape(BT, hw, c), blk["dw_w"], blk["dw_b"],
                           masks, W=cw)                        # (BT, hw, c)
            fuse_ln = (not last_stage) and bi == depth - 1     # pre-downsample LN
            post_ln = ((params["downsample"][si]["ln_g"],
                        params["downsample"][si]["ln_b"]) if fuse_ln else None)
            feat = cnblock_tail(dw.reshape(BT * hw, c), feat,
                                blk["ln_g"], blk["ln_b"], blk["w1"], blk["b1"],
                                blk["w2"], blk["b2"], blk["gamma"],
                                post_ln=post_ln)
        if not last_stage:
            ds = params["downsample"][si]
            xp2, ch, cw = _patchify(feat.reshape(BT, ch, cw, c), 2)
            feat = dense(xp2, ds["w"], ds["b"], out_dtype=jnp.bfloat16)

    c_last = dims[-1]
    # global average pool fused with the LSTM input projection (classifier is
    # Identity in the reference module, so features go straight to the LSTM)
    gates = pool_project(feat.reshape(BT, ch * cw, c_last),
                         params["lstm_w_ih"], params["lstm_b_ih"])   # (BT, 4H)
    gates = gates.reshape(B, T, 4 * lstm_hidden).transpose(1, 0, 2)  # (T, B, 4H)
    return lstm_last(gates, params["lstm_w_hh"], params["lstm_b_hh"],
                     hidden=lstm_hidden)                             # (B, H_lstm)


# ----------------------------------- main ------------------------------------

if __name__ == "__main__":
    # small, deterministic config (synthetic stand-in for convnext_base + LSTM)
    B, T = 2, 4
    C_IN, H, W = 3, 32, 32
    DIMS = (64, 128)          # stage channel dims (stand-in for 128..1024)
    DEPTHS = (2, 2)           # stand-in for (3, 3, 27, 3)
    LSTM_HIDDEN = 128         # stand-in for 768

    root = jax.random.PRNGKey(0)
    k_params, k_x = jax.random.split(root)
    params = init_params(k_params, in_ch=C_IN, dims=DIMS, depths=DEPTHS,
                         lstm_hidden=LSTM_HIDDEN)
    x = jax.random.normal(k_x, (B, C_IN, T, H, W), jnp.float32)

    out = convnext_lstm_forward(params, x, dims=DIMS, depths=DEPTHS,
                                lstm_hidden=LSTM_HIDDEN)
    out = jax.block_until_ready(out)

    assert out.shape == (B, LSTM_HIDDEN) and out.dtype == jnp.float32
    assert bool(jnp.all(jnp.isfinite(out)))
    print("KERNEL_OK")
</pallas_src>

<mosaic_0001>
module attributes {stable_mosaic.version = 11 : i64} {
  func.func @_dense1_kernel(%arg0: i32, %arg1: i32, %arg2: memref<256x48xbf16, #tpu.memory_space<vmem>>, %arg3: memref<48x64xbf16, #tpu.memory_space<vmem>>, %arg4: memref<1x64xf32, #tpu.memory_space<vmem>>, %arg5: memref<1x64xf32, #tpu.memory_space<vmem>>, %arg6: memref<1x64xf32, #tpu.memory_space<vmem>>, %arg7: memref<256x64xbf16, #tpu.memory_space<vmem>>) attributes {dimension_semantics = [#tpu.dimension_semantics<parallel>, #tpu.dimension_semantics<parallel>], iteration_bounds = array<i64: 2, 1>, scalar_prefetch = 0 : i64, scratch_operands = 0 : i64, tpu.core_type = #tpu.core_type<tc>, window_params = [{transform_indices = @transform_0, window_bounds = array<i64: 256, 48>}, {transform_indices = @transform_1, window_bounds = array<i64: 48, 64>}, {transform_indices = @transform_2, window_bounds = array<i64: 1, 64>}, {transform_indices = @transform_3, window_bounds = array<i64: 1, 64>}, {transform_indices = @transform_4, window_bounds = array<i64: 1, 64>}, {transform_indices = @transform_5, window_bounds = array<i64: 256, 64>}]} {
    %c0 = arith.constant 0 : index
    %c0_0 = arith.constant 0 : index
    %0 = vector.load %arg5[%c0, %c0_0] : memref<1x64xf32, #tpu.memory_space<vmem>>, vector<1x64xf32>
    %c0_1 = arith.constant 0 : index
    %c0_2 = arith.constant 0 : index
    %1 = vector.load %arg6[%c0_1, %c0_2] : memref<1x64xf32, #tpu.memory_space<vmem>>, vector<1x64xf32>
    %c0_3 = arith.constant 0 : index
    %c0_4 = arith.constant 0 : index
    %2 = vector.load %arg2[%c0_3, %c0_4] : memref<256x48xbf16, #tpu.memory_space<vmem>>, vector<256x48xbf16>
    %c0_5 = arith.constant 0 : index
    %c0_6 = arith.constant 0 : index
    %3 = vector.load %arg3[%c0_5, %c0_6] : memref<48x64xbf16, #tpu.memory_space<vmem>>, vector<48x64xbf16>
    %cst = arith.constant dense<0.000000e+00> : vector<256x64xf32>
    %4 = tpu.matmul %2, %3, %cst {dimension_numbers = #tpu.dot_dimension_numbers<[1], [0], [0], [1], [0, 0, 1, 1], [], []>} : vector<256x48xbf16>, vector<48x64xbf16>, vector<256x64xf32> -> vector<256x64xf32>
    %c0_7 = arith.constant 0 : index
    %c0_8 = arith.constant 0 : index
    %5 = vector.load %arg4[%c0_7, %c0_8] : memref<1x64xf32, #tpu.memory_space<vmem>>, vector<1x64xf32>
    %6 = vector.broadcast %5 : vector<1x64xf32> to vector<256x64xf32>
    %7 = arith.addf %4, %6 : vector<256x64xf32>
    %cst_9 = arith.constant dense<0.000000e+00> : vector<256xf32>
    %8 = vector.multi_reduction <add>, %7, %cst_9 [1] : vector<256x64xf32> to vector<256xf32>
    %9 = vector.shape_cast %8 : vector<256xf32> to vector<256x1xf32>
    %cst_10 = arith.constant 6.400000e+01 : f32
    %10 = vector.broadcast %cst_10 : f32 to vector<256x1xf32>
    %11 = arith.divf %9, %10 : vector<256x1xf32>
    %12 = vector.broadcast %11 : vector<256x1xf32> to vector<256x64xf32>
    %13 = arith.subf %7, %12 : vector<256x64xf32>
    %14 = vector.broadcast %11 : vector<256x1xf32> to vector<256x64xf32>
    %15 = arith.subf %7, %14 : vector<256x64xf32>
    %16 = arith.mulf %13, %15 : vector<256x64xf32>
    %cst_11 = arith.constant dense<0.000000e+00> : vector<256xf32>
    %17 = vector.multi_reduction <add>, %16, %cst_11 [1] : vector<256x64xf32> to vector<256xf32>
    %18 = vector.shape_cast %17 : vector<256xf32> to vector<256x1xf32>
    %cst_12 = arith.constant 6.400000e+01 : f32
    %19 = vector.broadcast %cst_12 : f32 to vector<256x1xf32>
    %20 = arith.divf %18, %19 : vector<256x1xf32>
    %21 = vector.broadcast %11 : vector<256x1xf32> to vector<256x64xf32>
    %22 = arith.subf %7, %21 : vector<256x64xf32>
    %cst_13 = arith.constant 9.99999997E-7 : f32
    %23 = vector.broadcast %cst_13 : f32 to vector<256x1xf32>
    %24 = arith.addf %20, %23 : vector<256x1xf32>
    %25 = math.rsqrt %24 : vector<256x1xf32>
    %26 = vector.broadcast %25 : vector<256x1xf32> to vector<256x64xf32>
    %27 = arith.mulf %22, %26 : vector<256x64xf32>
    %28 = vector.broadcast %0 : vector<1x64xf32> to vector<256x64xf32>
    %29 = arith.mulf %27, %28 : vector<256x64xf32>
    %30 = vector.broadcast %1 : vector<1x64xf32> to vector<256x64xf32>
    %31 = arith.addf %29, %30 : vector<256x64xf32>
    %32 = arith.truncf %31 : vector<256x64xf32> to vector<256x64xbf16>
    %c0_14 = arith.constant 0 : index
    %c0_15 = arith.constant 0 : index
    %33 = vector.load %arg7[%c0_14, %c0_15] : memref<256x64xbf16, #tpu.memory_space<vmem>>, vector<256x64xbf16>
    tpu.vector_store %arg7[%c0_14, %c0_15], %32 {strides = array<i32>} : memref<256x64xbf16, #tpu.memory_space<vmem>>, vector<256x64xbf16>,
    return
  }
  func.func @transform_0(%arg0: i32, %arg1: i32) -> (i32, i32) {
    %c0_i32 = arith.constant 0 : i32
    %c0_i32_0 = arith.constant 0 : i32
    return %arg0, %c0_i32 : i32, i32
  }
  func.func @transform_1(%arg0: i32, %arg1: i32) -> (i32, i32) {
    %c0_i32 = arith.constant 0 : i32
    %c0_i32_0 = arith.constant 0 : i32
    return %c0_i32, %arg1 : i32, i32
  }
  func.func @transform_2(%arg0: i32, %arg1: i32) -> (i32, i32) {
    %c0_i32 = arith.constant 0 : i32
    %c0_i32_0 = arith.constant 0 : i32
    return %c0_i32, %arg1 : i32, i32
  }
  func.func @transform_3(%arg0: i32, %arg1: i32) -> (i32, i32) {
    %c0_i32 = arith.constant 0 : i32
    %c0_i32_0 = arith.constant 0 : i32
    return %c0_i32, %arg1 : i32, i32
  }
  func.func @transform_4(%arg0: i32, %arg1: i32) -> (i32, i32) {
    %c0_i32 = arith.constant 0 : i32
    %c0_i32_0 = arith.constant 0 : i32
    return %c0_i32, %arg1 : i32, i32
  }
  func.func @transform_5(%arg0: i32, %arg1: i32) -> (i32, i32) {
    %c0_i32 = arith.constant 0 : i32
    return %arg0, %arg1 : i32, i32
  }
}

</mosaic_0001>

<llo_original>
// kernel: tpu_custom_call.1
$region0: #{tpu_custom_call.1}
  #allocation0 [shape = 'u32[]', space=smem, size = 0x4, offset = 0x4, fixed_abs, tag = 'smem constant byte address 0x4 - core index']
  #allocation1 [shape = 'u32[144,128]{1,0:T(1,128)}', space=vmem, size = 0x12000, scoped, tag = 'internal scratch']
  %s0 = inlined_call_operand.vmem [shape: bf16[512,48], index: 0, kind: input, shape index: {}]
  %s1 = inlined_call_operand.vmem [shape: bf16[48,64], index: 1, kind: input, shape index: {}]
  %s2 = inlined_call_operand.vmem [shape: f32[1,64], index: 2, kind: input, shape index: {}]
  %s3 = inlined_call_operand.vmem [shape: f32[1,64], index: 3, kind: input, shape index: {}]
  %s4 = inlined_call_operand.vmem [shape: f32[1,64], index: 4, kind: input, shape index: {}]
  %s5 = inlined_call_operand.vmem [shape: bf16[512,64], index: 5, kind: output, shape index: {}]
  %s6 = sld [smem:[#allocation0]]
  $region53: #{tpu_custom_call.1} parent=0
    _
  %s8 = ssub.s32 1, %s6
  %s9 = scalar_select 0, %s8, %s6
  loop: start=0, step=1, limit=4
  $region2: #{tpu_custom_call.1} parent=0 // loop_pre_header
    _
  $region3: #{tpu_custom_call.1} parent=0 // loop_header
    %s11 = sphi 0, %s15
    %p12 = scmp.ge.s32.totalorder %s11, 4
    %s18 = sphi 0, %s30
    %s19 = sphi 0, %s26
    %s20 = sphi 0, %s18
    %s21 = sphi 0, %s19
    %s22 = sphi 0, %s20
    %s23 = sphi 0, %s21
    %s33 = sphi 0, %s35
    %s36 = sphi 0, %s33
    %s37 = sphi 0, %s36
    %s53 = sphi 0, %s37
    %s59 = sphi 0, %s61
    %s62 = sphi 0, %s59
    %s63 = sphi 0, %s62
    %s79 = sphi 0, %s63
    %s85 = sphi 0, %s87
    %s88 = sphi 0, %s85
    %s89 = sphi 0, %s88
    %s105 = sphi 0, %s89
    %s111 = sphi 0, %s113
    %s114 = sphi 0, %s111
    %s115 = sphi 0, %s114
    %s131 = sphi 0, %s115
    %s137 = sphi 0, %s139
    %s140 = sphi 0, %s137
    %s141 = sphi 0, %s140
    %s157 = sphi 0, %s141
    %s165 = sphi 0, %s167
    %s168 = sphi 0, %s165
    %s169 = sphi 0, %s168
    %s185 = sphi 0, %s169
  $region4: #{tpu_custom_call.1} parent=0 // loop_header_branch
    %14 = sbr.rel (%p12) target = $region8
  $region5: #{tpu_custom_call.1} parent=0 // loop_body
    %s16 = ssub.s32 %s11, 1
    %s17 = ssub.s32 %s11, 2
    %s24 = sadd.s32 1, %s19
    %p25 = scmp.ge.s32.totalorder %s24, 1
    %s26 = scalar_select %p25, 0, %s24
    %s27 = sadd.s32 1, %s18
    %s28 = scalar_select %p25, %s27, %s18
    %p29 = scmp.ge.s32.totalorder %s28, 2
    %s30 = scalar_select %p29, 0, %s28
    %s31 = ssub.s32 %s18, %s30
    %p32 = scmp.eq.s32.totalorder %s31, 0
    %s34 = sadd.s32 %s33, 1
    %s35 = scalar_select %p32, %s33, %s34
    %p38 = pneg %p32
    %p39 = scmp.eq.s32.totalorder %s11, 1
    %p40 = por %p38, %p39
    %p41 = scmp.ne.s32.totalorder %s33, %s36
    %p42 = scmp.eq.s32.totalorder %s11, 0
    %p43 = por %p41, %p42
    %p44 = scmp.ne.s32.totalorder %s33, %s36
    %p45 = scmp.eq.s32.totalorder %s16, 1
    %p46 = por %p44, %p45
    %p47 = scmp.ne.s32.totalorder %s36, %s37
    %p48 = scmp.eq.s32.totalorder %s16, 0
    %p49 = por %p47, %p48
    %p50 = scmp.ne.s32.totalorder %s36, %s37
    %p51 = scmp.eq.s32.totalorder %s17, 1
    %p52 = por %p50, %p51
    %p54 = scmp.ne.s32.totalorder %s37, %s53
    %p55 = scmp.eq.s32.totalorder %s17, 0
    %p56 = por %p54, %p55
    %s57 = ssub.s32 %s19, %s26
    %p58 = scmp.eq.s32.totalorder %s57, 0
    %s60 = sadd.s32 %s59, 1
    %s61 = scalar_select %p58, %s59, %s60
    %p64 = pneg %p58
    %p65 = scmp.eq.s32.totalorder %s11, 1
    %p66 = por %p64, %p65
    %p67 = scmp.ne.s32.totalorder %s59, %s62
    %p68 = scmp.eq.s32.totalorder %s11, 0
    %p69 = por %p67, %p68
    %p70 = scmp.ne.s32.totalorder %s59, %s62
    %p71 = scmp.eq.s32.totalorder %s16, 1
    %p72 = por %p70, %p71
    %p73 = scmp.ne.s32.totalorder %s62, %s63
    %p74 = scmp.eq.s32.totalorder %s16, 0
    %p75 = por %p73, %p74
    %p76 = scmp.ne.s32.totalorder %s62, %s63
    %p77 = scmp.eq.s32.totalorder %s17, 1
    %p78 = por %p76, %p77
    %p80 = scmp.ne.s32.totalorder %s63, %s79
    %p81 = scmp.eq.s32.totalorder %s17, 0
    %p82 = por %p80, %p81
    %s83 = ssub.s32 %s19, %s26
    %p84 = scmp.eq.s32.totalorder %s83, 0
    %s86 = sadd.s32 %s85, 1
    %s87 = scalar_select %p84, %s85, %s86
    %p90 = pneg %p84
    %p91 = scmp.eq.s32.totalorder %s11, 1
    %p92 = por %p90, %p91
    %p93 = scmp.ne.s32.totalorder %s85, %s88
    %p94 = scmp.eq.s32.totalorder %s11, 0
    %p95 = por %p93, %p94
    %p96 = scmp.ne.s32.totalorder %s85, %s88
    %p97 = scmp.eq.s32.totalorder %s16, 1
    %p98 = por %p96, %p97
    %p99 = scmp.ne.s32.totalorder %s88, %s89
    %p100 = scmp.eq.s32.totalorder %s16, 0
    %p101 = por %p99, %p100
    %p102 = scmp.ne.s32.totalorder %s88, %s89
    %p103 = scmp.eq.s32.totalorder %s17, 1
    %p104 = por %p102, %p103
    %p106 = scmp.ne.s32.totalorder %s89, %s105
    %p107 = scmp.eq.s32.totalorder %s17, 0
    %p108 = por %p106, %p107
    %s109 = ssub.s32 %s19, %s26
    %p110 = scmp.eq.s32.totalorder %s109, 0
    %s112 = sadd.s32 %s111, 1
    %s113 = scalar_select %p110, %s111, %s112
    %p116 = pneg %p110
    %p117 = scmp.eq.s32.totalorder %s11, 1
    %p118 = por %p116, %p117
    %p119 = scmp.ne.s32.totalorder %s111, %s114
    %p120 = scmp.eq.s32.totalorder %s11, 0
    %p121 = por %p119, %p120
    %p122 = scmp.ne.s32.totalorder %s111, %s114
    %p123 = scmp.eq.s32.totalorder %s16, 1
    %p124 = por %p122, %p123
    %p125 = scmp.ne.s32.totalorder %s114, %s115
    %p126 = scmp.eq.s32.totalorder %s16, 0
    %p127 = por %p125, %p126
    %p128 = scmp.ne.s32.totalorder %s114, %s115
    %p129 = scmp.eq.s32.totalorder %s17, 1
    %p130 = por %p128, %p129
    %p132 = scmp.ne.s32.totalorder %s115, %s131
    %p133 = scmp.eq.s32.totalorder %s17, 0
    %p134 = por %p132, %p133
    %s135 = ssub.s32 %s19, %s26
    %p136 = scmp.eq.s32.totalorder %s135, 0
    %s138 = sadd.s32 %s137, 1
    %s139 = scalar_select %p136, %s137, %s138
    %p142 = pneg %p136
    %p143 = scmp.eq.s32.totalorder %s11, 1
    %p144 = por %p142, %p143
    %p145 = scmp.ne.s32.totalorder %s137, %s140
    %p146 = scmp.eq.s32.totalorder %s11, 0
    %p147 = por %p145, %p146
    %p148 = scmp.ne.s32.totalorder %s137, %s140
    %p149 = scmp.eq.s32.totalorder %s16, 1
    %p150 = por %p148, %p149
    %p151 = scmp.ne.s32.totalorder %s140, %s141
    %p152 = scmp.eq.s32.totalorder %s16, 0
    %p153 = por %p151, %p152
    %p154 = scmp.ne.s32.totalorder %s140, %s141
    %p155 = scmp.eq.s32.totalorder %s17, 1
    %p156 = por %p154, %p155
    %p158 = scmp.ne.s32.totalorder %s141, %s157
    %p159 = scmp.eq.s32.totalorder %s17, 0
    %p160 = por %p158, %p159
    %s161 = ssub.s32 %s18, %s30
    %s162 = ssub.s32 %s19, %s26
    %s163 = sor.u32 %s161, %s162
    %p164 = scmp.eq.s32.totalorder %s163, 0
    %s166 = sadd.s32 %s165, 1
    %s167 = scalar_select %p164, %s165, %s166
    %p170 = pneg %p164
    %p171 = scmp.eq.s32.totalorder %s11, 1
    %p172 = por %p170, %p171
    %p173 = scmp.ne.s32.totalorder %s165, %s168
    %p174 = scmp.eq.s32.totalorder %s11, 0
    %p175 = por %p173, %p174
    %p176 = scmp.ne.s32.totalorder %s165, %s168
    %p177 = scmp.eq.s32.totalorder %s16, 1
    %p178 = por %p176, %p177
    %p179 = scmp.ne.s32.totalorder %s168, %s169
    %p180 = scmp.eq.s32.totalorder %s16, 0
    %p181 = por %p179, %p180
    %p182 = scmp.ne.s32.totalorder %s168, %s169
    %p183 = scmp.eq.s32.totalorder %s17, 1
    %p184 = por %p182, %p183
    %p186 = scmp.ne.s32.totalorder %s169, %s185
    %p187 = scmp.eq.s32.totalorder %s17, 0
    %p188 = por %p186, %p187
    %p189 = scmp.le.s32.totalorder 1, %s11
    %p190 = scmp.lt.s32.totalorder %s11, 3
    %p191 = pnand %p189, %p190
    %p192 = pneg %p191
    // Predicated region
    $region9: #{tpu_custom_call.1} parent=5 // pred_check
      _
    $region10: #{tpu_custom_call.1} parent=5 // pred_check_branch
      %194 = sbr.rel (%p191) target = $region12
    $region11: #{tpu_custom_call.1} parent=5 // pred_region
      %s195 = ssub.s32 %s11, 1
      // Predicated region
      $region13: #{tpu_custom_call.1} parent=11 // pred_check
        %p196 = pneg %p75
      $region14: #{tpu_custom_call.1} parent=11 // pred_check_branch
        %198 = sbr.rel (%p196) target = $region16
      $region15: #{tpu_custom_call.1} parent=11 // pred_region
        %p199 = scmp.lt.s32.totalorder %s21, 0
        %s200 = scalar_select %p199, %s21, 0
        %s201 = smul.addr %s200, 4
        %s202 = scalar_lea.vmem %s1, %s201
      $region16: #{tpu_custom_call.1} parent=11 // pred_fallthru
        _
      // Predicated region
      $region17: #{tpu_custom_call.1} parent=11 // pred_check
        %p203 = pneg %p101
      $region18: #{tpu_custom_call.1} parent=11 // pred_check_branch
        %205 = sbr.rel (%p203) target = $region20
      $region19: #{tpu_custom_call.1} parent=11 // pred_region
        %p206 = scmp.lt.s32.totalorder %s21, 0
        %s207 = scalar_select %p206, %s21, 0
        %s208 = scalar_lea.vmem %s2, %s207
      $region20: #{tpu_custom_call.1} parent=11 // pred_fallthru
        _
      // Predicated region
      $region21: #{tpu_custom_call.1} parent=11 // pred_check
        %p209 = pneg %p127
      $region22: #{tpu_custom_call.1} parent=11 // pred_check_branch
        %211 = sbr.rel (%p209) target = $region24
      $region23: #{tpu_custom_call.1} parent=11 // pred_region
        %p212 = scmp.lt.s32.totalorder %s21, 0
        %s213 = scalar_select %p212, %s21, 0
        %s214 = scalar_lea.vmem %s3, %s213
      $region24: #{tpu_custom_call.1} parent=11 // pred_fallthru
        _
      // Predicated region
      $region25: #{tpu_custom_call.1} parent=11 // pred_check
        %p215 = pneg %p153
      $region26: #{tpu_custom_call.1} parent=11 // pred_check_branch
        %217 = sbr.rel (%p215) target = $region28
      $region27: #{tpu_custom_call.1} parent=11 // pred_region
        %p218 = scmp.lt.s32.totalorder %s21, 0
        %s219 = scalar_select %p218, %s21, 0
        %s220 = scalar_lea.vmem %s4, %s219
      $region28: #{tpu_custom_call.1} parent=11 // pred_fallthru
        _
    $region12: #{tpu_custom_call.1} parent=5 // pred_fallthru
      _
    %p221 = scmp.lt.s32.totalorder %s11, 2
    // Predicated region
    $region29: #{tpu_custom_call.1} parent=5 // pred_check
      %p222 = pneg %p221
    $region30: #{tpu_custom_call.1} parent=5 // pred_check_branch
      %224 = sbr.rel (%p222) target = $region32
    $region31: #{tpu_custom_call.1} parent=5 // pred_region
      // Predicated region
      $region33: #{tpu_custom_call.1} parent=31 // pred_check
        %p225 = pneg %p43
      $region34: #{tpu_custom_call.1} parent=31 // pred_check_branch
        %227 = sbr.rel (%p225) target = $region36
      $region35: #{tpu_custom_call.1} parent=31 // pred_region
        %s228 = smul.u32 32, %s18
        %p229 = scmp.lt.s32.totalorder %s228, 63
        %s230 = scalar_select %p229, %s228, 63
        %s231 = smul.addr %s230, 4
        %s232 = scalar_lea.vmem %s0, %s231
        %s233 = smul.u32 32, %s18
      $region36: #{tpu_custom_call.1} parent=31 // pred_fallthru
        _
    $region32: #{tpu_custom_call.1} parent=5 // pred_fallthru
      _
    %p234 = scmp.le.s32.totalorder 1, %s11
    %p235 = scmp.lt.s32.totalorder %s11, 3
    %p236 = pnand %p234, %p235
    %p237 = pneg %p236
    // Predicated region
    $region37: #{tpu_custom_call.1} parent=5 // pred_check
      _
    $region38: #{tpu_custom_call.1} parent=5 // pred_check_branch
      %239 = sbr.rel (%p236) target = $region40
    $region39: #{tpu_custom_call.1} parent=5 // pred_region
      %s240 = ssub.s32 %s11, 1
      %s241 = smul.u32 32, %s20
      %p242 = scmp.lt.s32.totalorder %s241, 63
      %s243 = scalar_select %p242, %s241, 63
      %s244 = smul.addr %s243, 4
      %s245 = scalar_lea.vmem %s0, %s244
      %p246 = pneg %p49
      %p247 = pneg %p46
      %p248 = scmp.lt.s32.totalorder %s21, 0
      %s249 = scalar_select %p248, %s21, 0
      %s250 = smul.addr %s249, 4
      %s251 = scalar_lea.vmem %s1, %s250
      %p252 = pneg %p75
      %p253 = pneg %p72
      %p254 = scmp.lt.s32.totalorder %s21, 0
      %s255 = scalar_select %p254, %s21, 0
      %s256 = scalar_lea.vmem %s2, %s255
      %p257 = pneg %p101
      %p258 = pneg %p98
      %p259 = scmp.lt.s32.totalorder %s21, 0
      %s260 = scalar_select %p259, %s21, 0
      %s261 = scalar_lea.vmem %s3, %s260
      %p262 = pneg %p127
      %p263 = pneg %p124
      %p264 = scmp.lt.s32.totalorder %s21, 0
      %s265 = scalar_select %p264, %s21, 0
      %s266 = scalar_lea.vmem %s4, %s265
      %p267 = pneg %p153
      %p268 = pneg %p150
      %p269 = pneg %p181
      %p270 = pneg %p178
      %s271 = smul.u32 32, %s20
      %p272 = scmp.lt.s32.totalorder %s271, 63
      %s273 = scalar_select %p272, %s271, 63
      %p274 = scmp.lt.s32.totalorder %s21, 0
      %s275 = scalar_select %p274, %s21, 0
      %s276 = sadd.s32 %s275, %s273
      %s277 = smul.addr %s276, 4
      %s278 = scalar_lea.vmem %s5, %s277
      %s279 = smul.u32 32, %s20
      %p280 = scmp.lt.s32.totalorder %s279, 63
      %s281 = scalar_select %p280, %s279, 63
      %s282 = smul.addr %s281, 4
      %s283 = scalar_lea.vmem %s0, %s282
      %s284 = smul.u32 32, %s20
      %p285 = scmp.lt.s32.totalorder %s21, 0
      %s286 = scalar_select %p285, %s21, 0
      %s287 = smul.addr %s286, 4
      %s288 = scalar_lea.vmem %s1, %s287
      %p289 = scmp.lt.s32.totalorder %s21, 0
      %s290 = scalar_select %p289, %s21, 0
      %s291 = scalar_lea.vmem %s2, %s290
      %p292 = scmp.lt.s32.totalorder %s21, 0
      %s293 = scalar_select %p292, %s21, 0
      %s294 = scalar_lea.vmem %s3, %s293
      %p295 = scmp.lt.s32.totalorder %s21, 0
      %s296 = scalar_select %p295, %s21, 0
      %s297 = scalar_lea.vmem %s4, %s296
      %s298 = smul.u32 32, %s20
      %p299 = scmp.lt.s32.totalorder %s298, 63
      %s300 = scalar_select %p299, %s298, 63
      %p301 = scmp.lt.s32.totalorder %s21, 0
      %s302 = scalar_select %p301, %s21, 0
      %s303 = sadd.s32 %s302, %s300
      %s304 = smul.addr %s303, 4
      %s305 = scalar_lea.vmem %s5, %s304
      %s306 = smul.u32 32, %s20
      %v308 = vld [vmem:[%s294] sm:$0x1]
      %v309 = vld [vmem:[%s297] sm:$0x1]
      %v310 = vld [vmem:[%s283] sm:$0xf]
      %v311 = vld [vmem:[%s283 + $0x4] sm:$0xf]
      %v312 = vld [vmem:[%s283 + $0x8] sm:$0xf]
      %v313 = vld [vmem:[%s283 + $0xc] sm:$0xf]
      %v314 = vld [vmem:[%s283 + $0x10] sm:$0xf]
      %v315 = vld [vmem:[%s283 + $0x14] sm:$0xf]
      %v316 = vld [vmem:[%s283 + $0x18] sm:$0xf]
      %v317 = vld [vmem:[%s283 + $0x1c] sm:$0xf]
      %v318 = vld [vmem:[%s283 + $0x20] sm:$0xf]
      %v319 = vld [vmem:[%s283 + $0x24] sm:$0xf]
      %v320 = vld [vmem:[%s283 + $0x28] sm:$0xf]
      %v321 = vld [vmem:[%s283 + $0x2c] sm:$0xf]
      %v322 = vld [vmem:[%s283 + $0x30] sm:$0xf]
      %v323 = vld [vmem:[%s283 + $0x34] sm:$0xf]
      %v324 = vld [vmem:[%s283 + $0x38] sm:$0xf]
      %v325 = vld [vmem:[%s283 + $0x3c] sm:$0xf]
      %v326 = vld [vmem:[%s283 + $0x40] sm:$0xf]
      %v327 = vld [vmem:[%s283 + $0x44] sm:$0xf]
      %v328 = vld [vmem:[%s283 + $0x48] sm:$0xf]
      %v329 = vld [vmem:[%s283 + $0x4c] sm:$0xf]
      %v330 = vld [vmem:[%s283 + $0x50] sm:$0xf]
      %v331 = vld [vmem:[%s283 + $0x54] sm:$0xf]
      %v332 = vld [vmem:[%s283 + $0x58] sm:$0xf]
      %v333 = vld [vmem:[%s283 + $0x5c] sm:$0xf]
      %v334 = vld [vmem:[%s283 + $0x60] sm:$0xf]
      %v335 = vld [vmem:[%s283 + $0x64] sm:$0xf]
      %v336 = vld [vmem:[%s283 + $0x68] sm:$0xf]
      %v337 = vld [vmem:[%s283 + $0x6c] sm:$0xf]
      %v338 = vld [vmem:[%s283 + $0x70] sm:$0xf]
      %v339 = vld [vmem:[%s283 + $0x74] sm:$0xf]
      %v340 = vld [vmem:[%s283 + $0x78] sm:$0xf]
      %v341 = vld [vmem:[%s283 + $0x7c] sm:$0xf]
      %v342 = vld [vmem:[%s288] sm:$0xf]
      %v343 = vld [vmem:[%s288 + $0x4] sm:$0xf]
      %v344 = vld [vmem:[%s288 + $0x8] sm:$0xf]
      %v345 = vld [vmem:[%s288 + $0xc] sm:$0xf]
      %v346 = vld [vmem:[%s288 + $0x10] sm:$0xf]
      %v347 = vld [vmem:[%s288 + $0x14] sm:$0xf]
      %v348 = vld [vmem:[%s291] sm:$0x1]
      %v350 = vlaneseq
      %v351 = vshrl.u32 %v350, 7
      %v352 = vsub.s32 0, %v351
      %v353 = vrot.slane %v348, %v352
      %v387 = vunpack.c.l.b16 %v310
      %v388 = vunpack.c.l.b16 %v311
      %v389 = vunpack.c.l.b16 %v312
      %v390 = vunpack.c.l.b16 %v313
      %v391 = vunpack.c.l.b16 %v314
      %v392 = vunpack.c.l.b16 %v315
      %v393 = vunpack.c.l.b16 %v316
      %v394 = vunpack.c.l.b16 %v317
      %v395 = vunpack.c.l.b16 %v318
      %v396 = vunpack.c.l.b16 %v319
      %v397 = vunpack.c.l.b16 %v320
      %v398 = vunpack.c.l.b16 %v321
      %v399 = vunpack.c.l.b16 %v322
      %v400 = vunpack.c.l.b16 %v323
      %v401 = vunpack.c.l.b16 %v324
      %v402 = vunpack.c.l.b16 %v325
      %v403 = vunpack.c.l.b16 %v326
      %v404 = vunpack.c.l.b16 %v327
      %v405 = vunpack.c.l.b16 %v328
      %v406 = vunpack.c.l.b16 %v329
      %v407 = vunpack.c.l.b16 %v330
      %v408 = vunpack.c.l.b16 %v331
      %v409 = vunpack.c.l.b16 %v332
      %v410 = vunpack.c.l.b16 %v333
      %v411 = vunpack.c.l.b16 %v334
      %v412 = vunpack.c.l.b16 %v335
      %v413 = vunpack.c.l.b16 %v336
      %v414 = vunpack.c.l.b16 %v337
      %v415 = vunpack.c.l.b16 %v338
      %v416 = vunpack.c.l.b16 %v339
      %v417 = vunpack.c.l.b16 %v340
      %v418 = vunpack.c.l.b16 %v341
      %v419 = vpack.c.b16 %v388, %v387
      %v420 = vpack.c.b16 %v390, %v389
      %v421 = vpack.c.b16 %v392, %v391
      %v422 = vpack.c.b16 %v394, %v393
      %v423 = vpack.c.b16 %v396, %v395
      %v424 = vpack.c.b16 %v398, %v397
      %v425 = vpack.c.b16 %v400, %v399
      %v426 = vpack.c.b16 %v402, %v401
      %v427 = vpack.c.b16 %v404, %v403
      %v428 = vpack.c.b16 %v406, %v405
      %v429 = vpack.c.b16 %v408, %v407
      %v430 = vpack.c.b16 %v410, %v409
      %v431 = vpack.c.b16 %v412, %v411
      %v432 = vpack.c.b16 %v414, %v413
      %v433 = vpack.c.b16 %v416, %v415
      %v434 = vpack.c.b16 %v418, %v417
      %v441 = vunpack.c.l.b16 %v342
      %v442 = vunpack.c.l.b16 %v343
      %v443 = vunpack.c.l.b16 %v344
      %v444 = vunpack.c.l.b16 %v345
      %v445 = vunpack.c.l.b16 %v346
      %v446 = vunpack.c.l.b16 %v347
      %v447 = vpack.c.b16 %v442, %v441
      %v448 = vpack.c.b16 %v444, %v443
      %v449 = vpack.c.b16 %v446, %v445
      %vm453 = vcmask 392192
      %v455 = vsel %vm453, %v419, 0
      %v458 = vsel %vm453, %v420, 0
      %v461 = vsel %vm453, %v421, 0
      %v464 = vsel %vm453, %v422, 0
      %v467 = vsel %vm453, %v423, 0
      %v470 = vsel %vm453, %v424, 0
      %v473 = vsel %vm453, %v425, 0
      %v476 = vsel %vm453, %v426, 0
      %v479 = vsel %vm453, %v427, 0
      %v482 = vsel %vm453, %v428, 0
      %v485 = vsel %vm453, %v429, 0
      %v488 = vsel %vm453, %v430, 0
      %v491 = vsel %vm453, %v431, 0
      %v494 = vsel %vm453, %v432, 0
      %v497 = vsel %vm453, %v433, 0
      %v500 = vsel %vm453, %v434, 0
      %502 = vmatprep.subr.bf16.mxu0 0
      %503 = vmatpush1.bf16.msra.mxu0 %v447
      %504 = vmatprep.subr.bf16.mxu0 0
      %505 = vmatpush1.bf16.msra.mxu0 %v448
      %506 = vmatprep.subr.bf16.mxu0 0
      %507 = vmatpush1.bf16.msra.mxu0 %v449
      %508 = vmatprep.subr.bf16.mxu0 0
      %509 = vmatpush1.bf16.msra.mxu0 0
      %510 = vmatprep.subr.bf16.mxu0 0
      %511 = vmatpush1.bf16.msra.mxu0 0
      %512 = vmatprep.subr.bf16.mxu0 0
      %513 = vmatpush1.bf16.msra.mxu0 0
      %514 = vmatprep.subr.bf16.mxu0 0
      %515 = vmatpush1.bf16.msra.mxu0 0
      %516 = vmatprep.subr.bf16.mxu0 0
      %517 = vmatpush1.bf16.msra.mxu0 0
      %518 = vmatprep.subr.bf16.mxu0 0
      %519 = vmatpush1.bf16.msra.mxu0 0
      %520 = vmatprep.subr.bf16.mxu0 0
      %521 = vmatpush1.bf16.msra.mxu0 0
      %522 = vmatprep.subr.bf16.mxu0 0
      %523 = vmatpush1.bf16.msra.mxu0 0
      %524 = vmatprep.subr.bf16.mxu0 0
      %525 = vmatpush1.bf16.msra.mxu0 0
      %526 = vmatprep.subr.bf16.mxu0 0
      %527 = vmatpush1.bf16.msra.mxu0 0
      %528 = vmatprep.subr.bf16.mxu0 0
      %529 = vmatpush1.bf16.msra.mxu0 0
      %530 = vmatprep.subr.bf16.mxu0 0
      %531 = vmatpush1.bf16.msra.mxu0 0
      %532 = vmatprep.subr.bf16.mxu0 0
      %533 = vmatpush1.bf16.msra.mxu0 0
      %534 = vmatprep.mubr.bf16.mxu0 0
      %535 = vmatmul.mubr.bf16.gmra.mrb[0].mxu0 %v455
      %v536 = vpop.f32.mrb[0].mxu0
      %v537 = vadd.f32 %v353, %v536
      %v538 = vpop.f32.mrb[0].mxu0
      %v539 = vpop.f32.mrb[0].mxu0
      %v540 = vadd.f32 %v353, %v539
      %v541 = vpop.f32.mrb[0].mxu0
      %542 = vmatprep.mubr.bf16.mxu0 0
      %543 = vmatmul.mubr.bf16.gmra.mrb[0].mxu0 %v458
      %v544 = vpop.f32.mrb[0].mxu0
      %v545 = vadd.f32 %v353, %v544
      %v546 = vpop.f32.mrb[0].mxu0
      %v547 = vpop.f32.mrb[0].mxu0
      %v548 = vadd.f32 %v353, %v547
      %v549 = vpop.f32.mrb[0].mxu0
      %550 = vmatprep.mubr.bf16.mxu0 0
      %551 = vmatmul.mubr.bf16.gmra.mrb[0].mxu0 %v461
      %v552 = vpop.f32.mrb[0].mxu0
      %v553 = vadd.f32 %v353, %v552
      %v554 = vpop.f32.mrb[0].mxu0
      %v555 = vpop.f32.mrb[0].mxu0
      %v556 = vadd.f32 %v353, %v555
      %v557 = vpop.f32.mrb[0].mxu0
      %558 = vmatprep.mubr.bf16.mxu0 0
      %559 = vmatmul.mubr.bf16.gmra.mrb[0].mxu0 %v464
      %v560 = vpop.f32.mrb[0].mxu0
      %v561 = vadd.f32 %v353, %v560
      %v562 = vpop.f32.mrb[0].mxu0
      %v563 = vpop.f32.mrb[0].mxu0
      %v564 = vadd.f32 %v353, %v563
      %v565 = vpop.f32.mrb[0].mxu0
      %566 = vmatprep.mubr.bf16.mxu0 0
      %567 = vmatmul.mubr.bf16.gmra.mrb[0].mxu0 %v467
      %v568 = vpop.f32.mrb[0].mxu0
      %v569 = vadd.f32 %v353, %v568
      %v570 = vpop.f32.mrb[0].mxu0
      %v571 = vpop.f32.mrb[0].mxu0
      %v572 = vadd.f32 %v353, %v571
      %v573 = vpop.f32.mrb[0].mxu0
      %574 = vmatprep.mubr.bf16.mxu0 0
      %575 = vmatmul.mubr.bf16.gmra.mrb[0].mxu0 %v470
      %v576 = vpop.f32.mrb[0].mxu0
      %v577 = vadd.f32 %v353, %v576
      %v578 = vpop.f32.mrb[0].mxu0
      %v579 = vpop.f32.mrb[0].mxu0
      %v580 = vadd.f32 %v353, %v579
      %v581 = vpop.f32.mrb[0].mxu0
      %582 = vmatprep.mubr.bf16.mxu0 0
      %583 = vmatmul.mubr.bf16.gmra.mrb[0].mxu0 %v473
      %v584 = vpop.f32.mrb[0].mxu0
      %v585 = vadd.f32 %v353, %v584
      %v586 = vpop.f32.mrb[0].mxu0
      %v587 = vpop.f32.mrb[0].mxu0
      %v588 = vadd.f32 %v353, %v587
      %v589 = vpop.f32.mrb[0].mxu0
      %590 = vmatprep.mubr.bf16.mxu0 0
      %591 = vmatmul.mubr.bf16.gmra.mrb[0].mxu0 %v476
      %v592 = vpop.f32.mrb[0].mxu0
      %v593 = vadd.f32 %v353, %v592
      %v594 = vpop.f32.mrb[0].mxu0
      %v595 = vpop.f32.mrb[0].mxu0
      %v596 = vadd.f32 %v353, %v595
      %v597 = vpop.f32.mrb[0].mxu0
      %598 = vmatprep.mubr.bf16.mxu0 0
      %599 = vmatmul.mubr.bf16.gmra.mrb[0].mxu0 %v479
      %v600 = vpop.f32.mrb[0].mxu0
      %v601 = vadd.f32 %v353, %v600
      %v602 = vpop.f32.mrb[0].mxu0
      %v603 = vpop.f32.mrb[0].mxu0
      %v604 = vadd.f32 %v353, %v603
      %v605 = vpop.f32.mrb[0].mxu0
      %606 = vmatprep.mubr.bf16.mxu0 0
      %607 = vmatmul.mubr.bf16.gmra.mrb[0].mxu0 %v482
      %v608 = vpop.f32.mrb[0].mxu0
      %v609 = vadd.f32 %v353, %v608
      %v610 = vpop.f32.mrb[0].mxu0
      %v611 = vpop.f32.mrb[0].mxu0
      %v612 = vadd.f32 %v353, %v611
      %v613 = vpop.f32.mrb[0].mxu0
      %614 = vmatprep.mubr.bf16.mxu0 0
      %615 = vmatmul.mubr.bf16.gmra.mrb[0].mxu0 %v485
      %v616 = vpop.f32.mrb[0].mxu0
      %v617 = vadd.f32 %v353, %v616
      %v618 = vpop.f32.mrb[0].mxu0
      %v619 = vpop.f32.mrb[0].mxu0
      %v620 = vadd.f32 %v353, %v619
      %v621 = vpop.f32.mrb[0].mxu0
      %622 = vmatprep.mubr.bf16.mxu0 0
      %623 = vmatmul.mubr.bf16.gmra.mrb[0].mxu0 %v488
      %v624 = vpop.f32.mrb[0].mxu0
      %v625 = vadd.f32 %v353, %v624
      %v626 = vpop.f32.mrb[0].mxu0
      %v627 = vpop.f32.mrb[0].mxu0
      %v628 = vadd.f32 %v353, %v627
      %v629 = vpop.f32.mrb[0].mxu0
      %630 = vmatprep.mubr.bf16.mxu0 0
      %631 = vmatmul.mubr.bf16.gmra.mrb[0].mxu0 %v491
      %v632 = vpop.f32.mrb[0].mxu0
      %v633 = vadd.f32 %v353, %v632
      %v634 = vpop.f32.mrb[0].mxu0
      %v635 = vpop.f32.mrb[0].mxu0
      %v636 = vadd.f32 %v353, %v635
      %v637 = vpop.f32.mrb[0].mxu0
      %638 = vmatprep.mubr.bf16.mxu0 0
      %639 = vmatmul.mubr.bf16.gmra.mrb[0].mxu0 %v494
      %v640 = vpop.f32.mrb[0].mxu0
      %v641 = vadd.f32 %v353, %v640
      %v642 = vpop.f32.mrb[0].mxu0
      %v643 = vpop.f32.mrb[0].mxu0
      %v644 = vadd.f32 %v353, %v643
      %v645 = vpop.f32.mrb[0].mxu0
      %646 = vmatprep.mubr.bf16.mxu0 0
      %647 = vmatmul.mubr.bf16.gmra.mrb[0].mxu0 %v497
      %v648 = vpop.f32.mrb[0].mxu0
      %v649 = vadd.f32 %v353, %v648
      %v650 = vpop.f32.mrb[0].mxu0
      %v651 = vpop.f32.mrb[0].mxu0
      %v652 = vadd.f32 %v353, %v651
      %v653 = vpop.f32.mrb[0].mxu0
      %654 = vmatprep.mubr.bf16.mxu0 0
      %655 = vmatmul.mubr.bf16.gmra.mrb[0].mxu0 %v500
      %v656 = vpop.f32.mrb[0].mxu0
      %v657 = vadd.f32 %v353, %v656
      %v658 = vpop.f32.mrb[0].mxu0
      %v659 = vpop.f32.mrb[0].mxu0
      %v660 = vadd.f32 %v353, %v659
      %v661 = vpop.f32.mrb[0].mxu0
      %662 = vdwg.mxu0
      %vm663 = vcmask 523264
      %v664 = vsel %vm663, %v537, 0.0
      %665 = vadd.xlane.f32.xlu0 %v664
      %v666 = vpop.xlane.xlu0 %665
      %v667 = vsel %vm663, %v540, 0.0
      %668 = vadd.xlane.f32.xlu0 %v667
      %v669 = vpop.xlane.xlu0 %668
      %v670 = vsel %vm663, %v545, 0.0
      %671 = vadd.xlane.f32.xlu0 %v670
      %v672 = vpop.xlane.xlu0 %671
      %v673 = vsel %vm663, %v548, 0.0
      %674 = vadd.xlane.f32.xlu0 %v673
      %v675 = vpop.xlane.xlu0 %674
      %v676 = vsel %vm663, %v553, 0.0
      %677 = vadd.xlane.f32.xlu0 %v676
      %v678 = vpop.xlane.xlu0 %677
      %v679 = vsel %vm663, %v556, 0.0
      %680 = vadd.xlane.f32.xlu0 %v679
      %v681 = vpop.xlane.xlu0 %680
      %v682 = vsel %vm663, %v561, 0.0
      %683 = vadd.xlane.f32.xlu0 %v682
      %v684 = vpop.xlane.xlu0 %683
      %v685 = vsel %vm663, %v564, 0.0
      %686 = vadd.xlane.f32.xlu0 %v685
      %v687 = vpop.xlane.xlu0 %686
      %v688 = vsel %vm663, %v569, 0.0
      %689 = vadd.xlane.f32.xlu0 %v688
      %v690 = vpop.xlane.xlu0 %689
      %v691 = vsel %vm663, %v572, 0.0
      %692 = vadd.xlane.f32.xlu0 %v691
      %v693 = vpop.xlane.xlu0 %692
      %v694 = vsel %vm663, %v577, 0.0
      %695 = vadd.xlane.f32.xlu0 %v694
      %v696 = vpop.xlane.xlu0 %695
      %v697 = vsel %vm663, %v580, 0.0
      %698 = vadd.xlane.f32.xlu0 %v697
      %v699 = vpop.xlane.xlu0 %698
      %v700 = vsel %vm663, %v585, 0.0
      %701 = vadd.xlane.f32.xlu0 %v700
      %v702 = vpop.xlane.xlu0 %701
      %v703 = vsel %vm663, %v588, 0.0
      %704 = vadd.xlane.f32.xlu0 %v703
      %v705 = vpop.xlane.xlu0 %704
      %v706 = vsel %vm663, %v593, 0.0
      %707 = vadd.xlane.f32.xlu0 %v706
      %v708 = vpop.xlane.xlu0 %707
      %v709 = vsel %vm663, %v596, 0.0
      %710 = vadd.xlane.f32.xlu0 %v709
      %v711 = vpop.xlane.xlu0 %710
      %v712 = vsel %vm663, %v601, 0.0
      %713 = vadd.xlane.f32.xlu0 %v712
      %v714 = vpop.xlane.xlu0 %713
      %v715 = vsel %vm663, %v604, 0.0
      %716 = vadd.xlane.f32.xlu0 %v715
      %v717 = vpop.xlane.xlu0 %716
      %v718 = vsel %vm663, %v609, 0.0
      %719 = vadd.xlane.f32.xlu0 %v718
      %v720 = vpop.xlane.xlu0 %719
      %v721 = vsel %vm663, %v612, 0.0
      %722 = vadd.xlane.f32.xlu0 %v721
      %v723 = vpop.xlane.xlu0 %722
      %v724 = vsel %vm663, %v617, 0.0
      %725 = vadd.xlane.f32.xlu0 %v724
      %v726 = vpop.xlane.xlu0 %725
      %v727 = vsel %vm663, %v620, 0.0
      %728 = vadd.xlane.f32.xlu0 %v727
      %v729 = vpop.xlane.xlu0 %728
      %v730 = vsel %vm663, %v625, 0.0
      %731 = vadd.xlane.f32.xlu0 %v730
      %v732 = vpop.xlane.xlu0 %731
      %v733 = vsel %vm663, %v628, 0.0
      %734 = vadd.xlane.f32.xlu0 %v733
      %v735 = vpop.xlane.xlu0 %734
      %v736 = vsel %vm663, %v633, 0.0
      %737 = vadd.xlane.f32.xlu0 %v736
      %v738 = vpop.xlane.xlu0 %737
      %v739 = vsel %vm663, %v636, 0.0
      %740 = vadd.xlane.f32.xlu0 %v739
      %v741 = vpop.xlane.xlu0 %740
      %v742 = vsel %vm663, %v641, 0.0
      %743 = vadd.xlane.f32.xlu0 %v742
      %v744 = vpop.xlane.xlu0 %743
      %v745 = vsel %vm663, %v644, 0.0
      %746 = vadd.xlane.f32.xlu0 %v745
      %v747 = vpop.xlane.xlu0 %746
      %v748 = vsel %vm663, %v649, 0.0
      %749 = vadd.xlane.f32.xlu0 %v748
      %v750 = vpop.xlane.xlu0 %749
      %v751 = vsel %vm663, %v652, 0.0
      %752 = vadd.xlane.f32.xlu0 %v751
      %v753 = vpop.xlane.xlu0 %752
      %v754 = vsel %vm663, %v657, 0.0
      %755 = vadd.xlane.f32.xlu0 %v754
      %v756 = vpop.xlane.xlu0 %755
      %v757 = vsel %vm663, %v660, 0.0
      %758 = vadd.xlane.f32.xlu0 %v757
      %v759 = vpop.xlane.xlu0 %758
      %v760 = vrcp.pop 64.0
      %v761 = vmul.f32 %v666, %v760
      %v762 = vmul.f32 %v669, %v760
      %v763 = vmul.f32 %v672, %v760
      %v764 = vmul.f32 %v675, %v760
      %v765 = vmul.f32 %v678, %v760
      %v766 = vmul.f32 %v681, %v760
      %v767 = vmul.f32 %v684, %v760
      %v768 = vmul.f32 %v687, %v760
      %v769 = vmul.f32 %v690, %v760
      %v770 = vmul.f32 %v693, %v760
      %v771 = vmul.f32 %v696, %v760
      %v772 = vmul.f32 %v699, %v760
      %v773 = vmul.f32 %v702, %v760
      %v774 = vmul.f32 %v705, %v760
      %v775 = vmul.f32 %v708, %v760
      %v776 = vmul.f32 %v711, %v760
      %v777 = vmul.f32 %v714, %v760
      %v778 = vmul.f32 %v717, %v760
      %v779 = vmul.f32 %v720, %v760
      %v780 = vmul.f32 %v723, %v760
      %v781 = vmul.f32 %v726, %v760
      %v782 = vmul.f32 %v729, %v760
      %v783 = vmul.f32 %v732, %v760
      %v784 = vmul.f32 %v735, %v760
      %v785 = vmul.f32 %v738, %v760
      %v786 = vmul.f32 %v741, %v760
      %v787 = vmul.f32 %v744, %v760
      %v788 = vmul.f32 %v747, %v760
      %v789 = vmul.f32 %v750, %v760
      %v790 = vmul.f32 %v753, %v760
      %v791 = vmul.f32 %v756, %v760
      %v792 = vmul.f32 %v759, %v760
      %v793 = vsub.f32 %v537, %v761
      %v794 = vsub.f32 %v540, %v762
      %v795 = vsub.f32 %v545, %v763
      %v796 = vsub.f32 %v548, %v764
      %v797 = vsub.f32 %v553, %v765
      %v798 = vsub.f32 %v556, %v766
      %v799 = vsub.f32 %v561, %v767
      %v800 = vsub.f32 %v564, %v768
      %v801 = vsub.f32 %v569, %v769
      %v802 = vsub.f32 %v572, %v770
      %v803 = vsub.f32 %v577, %v771
      %v804 = vsub.f32 %v580, %v772
      %v805 = vsub.f32 %v585, %v773
      %v806 = vsub.f32 %v588, %v774
      %v807 = vsub.f32 %v593, %v775
      %v808 = vsub.f32 %v596, %v776
      %v809 = vsub.f32 %v601, %v777
      %v810 = vsub.f32 %v604, %v778
      %v811 = vsub.f32 %v609, %v779
      %v812 = vsub.f32 %v612, %v780
      %v813 = vsub.f32 %v617, %v781
      %v814 = vsub.f32 %v620, %v782
      %v815 = vsub.f32 %v625, %v783
      %v816 = vsub.f32 %v628, %v784
      %v817 = vsub.f32 %v633, %v785
      %v818 = vsub.f32 %v636, %v786
      %v819 = vsub.f32 %v641, %v787
      %v820 = vsub.f32 %v644, %v788
      %v821 = vsub.f32 %v649, %v789
      %v822 = vsub.f32 %v652, %v790
      %v823 = vsub.f32 %v657, %v791
      %v824 = vsub.f32 %v660, %v792
      %v825 = vmul.f32 %v793, %v793
      %v826 = vmul.f32 %v794, %v794
      %v827 = vmul.f32 %v795, %v795
      %v828 = vmul.f32 %v796, %v796
      %v829 = vmul.f32 %v797, %v797
      %v830 = vmul.f32 %v798, %v798
      %v831 = vmul.f32 %v799, %v799
      %v832 = vmul.f32 %v800, %v800
      %v833 = vmul.f32 %v801, %v801
      %v834 = vmul.f32 %v802, %v802
      %v835 = vmul.f32 %v803, %v803
      %v836 = vmul.f32 %v804, %v804
      %v837 = vmul.f32 %v805, %v805
      %v838 = vmul.f32 %v806, %v806
      %v839 = vmul.f32 %v807, %v807
      %v840 = vmul.f32 %v808, %v808
      %v841 = vmul.f32 %v809, %v809
      %v842 = vmul.f32 %v810, %v810
      %v843 = vmul.f32 %v811, %v811
      %v844 = vmul.f32 %v812, %v812
      %v845 = vmul.f32 %v813, %v813
      %v846 = vmul.f32 %v814, %v814
      %v847 = vmul.f32 %v815, %v815
      %v848 = vmul.f32 %v816, %v816
      %v849 = vmul.f32 %v817, %v817
      %v850 = vmul.f32 %v818, %v818
      %v851 = vmul.f32 %v819, %v819
      %v852 = vmul.f32 %v820, %v820
      %v853 = vmul.f32 %v821, %v821
      %v854 = vmul.f32 %v822, %v822
      %v855 = vmul.f32 %v823, %v823
      %v856 = vmul.f32 %v824, %v824
      %v857 = vsel %vm663, %v825, 0.0
      %858 = vadd.xlane.f32.xlu0 %v857
      %v859 = vpop.xlane.xlu0 %858
      %v860 = vsel %vm663, %v826, 0.0
      %861 = vadd.xlane.f32.xlu0 %v860
      %v862 = vpop.xlane.xlu0 %861
      %v863 = vsel %vm663, %v827, 0.0
      %864 = vadd.xlane.f32.xlu0 %v863
      %v865 = vpop.xlane.xlu0 %864
      %v866 = vsel %vm663, %v828, 0.0
      %867 = vadd.xlane.f32.xlu0 %v866
      %v868 = vpop.xlane.xlu0 %867
      %v869 = vsel %vm663, %v829, 0.0
      %870 = vadd.xlane.f32.xlu0 %v869
      %v871 = vpop.xlane.xlu0 %870
      %v872 = vsel %vm663, %v830, 0.0
      %873 = vadd.xlane.f32.xlu0 %v872
      %v874 = vpop.xlane.xlu0 %873
      %v875 = vsel %vm663, %v831, 0.0
      %876 = vadd.xlane.f32.xlu0 %v875
      %v877 = vpop.xlane.xlu0 %876
      %v878 = vsel %vm663, %v832, 0.0
      %879 = vadd.xlane.f32.xlu0 %v878
      %v880 = vpop.xlane.xlu0 %879
      %v881 = vsel %vm663, %v833, 0.0
      %882 = vadd.xlane.f32.xlu0 %v881
      %v883 = vpop.xlane.xlu0 %882
      %v884 = vsel %vm663, %v834, 0.0
      %885 = vadd.xlane.f32.xlu0 %v884
      %v886 = vpop.xlane.xlu0 %885
      %v887 = vsel %vm663, %v835, 0.0
      %888 = vadd.xlane.f32.xlu0 %v887
      %v889 = vpop.xlane.xlu0 %888
      %v890 = vsel %vm663, %v836, 0.0
      %891 = vadd.xlane.f32.xlu0 %v890
      %v892 = vpop.xlane.xlu0 %891
      %v893 = vsel %vm663, %v837, 0.0
      %894 = vadd.xlane.f32.xlu0 %v893
      %v895 = vpop.xlane.xlu0 %894
      %v896 = vsel %vm663, %v838, 0.0
      %897 = vadd.xlane.f32.xlu0 %v896
      %v898 = vpop.xlane.xlu0 %897
      %v899 = vsel %vm663, %v839, 0.0
      %900 = vadd.xlane.f32.xlu0 %v899
      %v901 = vpop.xlane.xlu0 %900
      %v902 = vsel %vm663, %v840, 0.0
      %903 = vadd.xlane.f32.xlu0 %v902
      %v904 = vpop.xlane.xlu0 %903
      %v905 = vsel %vm663, %v841, 0.0
      %906 = vadd.xlane.f32.xlu0 %v905
      %v907 = vpop.xlane.xlu0 %906
      %v908 = vsel %vm663, %v842, 0.0
      %909 = vadd.xlane.f32.xlu0 %v908
      %v910 = vpop.xlane.xlu0 %909
      %v911 = vsel %vm663, %v843, 0.0
      %912 = vadd.xlane.f32.xlu0 %v911
      %v913 = vpop.xlane.xlu0 %912
      %v914 = vsel %vm663, %v844, 0.0
      %915 = vadd.xlane.f32.xlu0 %v914
      %v916 = vpop.xlane.xlu0 %915
      %v917 = vsel %vm663, %v845, 0.0
      %918 = vadd.xlane.f32.xlu0 %v917
      %v919 = vpop.xlane.xlu0 %918
      %v920 = vsel %vm663, %v846, 0.0
      %921 = vadd.xlane.f32.xlu0 %v920
      %v922 = vpop.xlane.xlu0 %921
      %v923 = vsel %vm663, %v847, 0.0
      %924 = vadd.xlane.f32.xlu0 %v923
      %v925 = vpop.xlane.xlu0 %924
      %v926 = vsel %vm663, %v848, 0.0
      %927 = vadd.xlane.f32.xlu0 %v926
      %v928 = vpop.xlane.xlu0 %927
      %v929 = vsel %vm663, %v849, 0.0
      %930 = vadd.xlane.f32.xlu0 %v929
      %v931 = vpop.xlane.xlu0 %930
      %v932 = vsel %vm663, %v850, 0.0
      %933 = vadd.xlane.f32.xlu0 %v932
      %v934 = vpop.xlane.xlu0 %933
      %v935 = vsel %vm663, %v851, 0.0
      %936 = vadd.xlane.f32.xlu0 %v935
      %v937 = vpop.xlane.xlu0 %936
      %v938 = vsel %vm663, %v852, 0.0
      %939 = vadd.xlane.f32.xlu0 %v938
      %v940 = vpop.xlane.xlu0 %939
      %v941 = vsel %vm663, %v853, 0.0
      %942 = vadd.xlane.f32.xlu0 %v941
      %v943 = vpop.xlane.xlu0 %942
      %v944 = vsel %vm663, %v854, 0.0
      %945 = vadd.xlane.f32.xlu0 %v944
      %v946 = vpop.xlane.xlu0 %945
      %v947 = vsel %vm663, %v855, 0.0
      %948 = vadd.xlane.f32.xlu0 %v947
      %v949 = vpop.xlane.xlu0 %948
      %v950 = vsel %vm663, %v856, 0.0
      %951 = vadd.xlane.f32.xlu0 %v950
      %v952 = vpop.xlane.xlu0 %951
      %v953 = vmul.f32 %v859, %v760
      %v954 = vmul.f32 %v862, %v760
      %v955 = vmul.f32 %v865, %v760
      %v956 = vmul.f32 %v868, %v760
      %v957 = vmul.f32 %v871, %v760
      %v958 = vmul.f32 %v874, %v760
      %v959 = vmul.f32 %v877, %v760
      %v960 = vmul.f32 %v880, %v760
      %v961 = vmul.f32 %v883, %v760
      %v962 = vmul.f32 %v886, %v760
      %v963 = vmul.f32 %v889, %v760
      %v964 = vmul.f32 %v892, %v760
      %v965 = vmul.f32 %v895, %v760
      %v966 = vmul.f32 %v898, %v760
      %v967 = vmul.f32 %v901, %v760
      %v968 = vmul.f32 %v904, %v760
      %v969 = vmul.f32 %v907, %v760
      %v970 = vmul.f32 %v910, %v760
      %v971 = vmul.f32 %v913, %v760
      %v972 = vmul.f32 %v916, %v760
      %v973 = vmul.f32 %v919, %v760
      %v974 = vmul.f32 %v922, %v760
      %v975 = vmul.f32 %v925, %v760
      %v976 = vmul.f32 %v928, %v760
      %v977 = vmul.f32 %v931, %v760
      %v978 = vmul.f32 %v934, %v760
      %v979 = vmul.f32 %v937, %v760
      %v980 = vmul.f32 %v940, %v760
      %v981 = vmul.f32 %v943, %v760
      %v982 = vmul.f32 %v946, %v760
      %v983 = vmul.f32 %v949, %v760
      %v984 = vmul.f32 %v952, %v760
      %v985 = vadd.f32 %v953, 1e-06
      %v986 = vadd.f32 %v954, 1e-06
      %v987 = vadd.f32 %v955, 1e-06
      %v988 = vadd.f32 %v956, 1e-06
      %v989 = vadd.f32 %v957, 1e-06
      %v990 = vadd.f32 %v958, 1e-06
      %v991 = vadd.f32 %v959, 1e-06
      %v992 = vadd.f32 %v960, 1e-06
      %v993 = vadd.f32 %v961, 1e-06
      %v994 = vadd.f32 %v962, 1e-06
      %v995 = vadd.f32 %v963, 1e-06
      %v996 = vadd.f32 %v964, 1e-06
      %v997 = vadd.f32 %v965, 1e-06
      %v998 = vadd.f32 %v966, 1e-06
      %v999 = vadd.f32 %v967, 1e-06
      %v1000 = vadd.f32 %v968, 1e-06
      %v1001 = vadd.f32 %v969, 1e-06
      %v1002 = vadd.f32 %v970, 1e-06
      %v1003 = vadd.f32 %v971, 1e-06
      %v1004 = vadd.f32 %v972, 1e-06
      %v1005 = vadd.f32 %v973, 1e-06
      %v1006 = vadd.f32 %v974, 1e-06
      %v1007 = vadd.f32 %v975, 1e-06
      %v1008 = vadd.f32 %v976, 1e-06
      %v1009 = vadd.f32 %v977, 1e-06
      %v1010 = vadd.f32 %v978, 1e-06
      %v1011 = vadd.f32 %v979, 1e-06
      %v1012 = vadd.f32 %v980, 1e-06
      %v1013 = vadd.f32 %v981, 1e-06
      %v1014 = vadd.f32 %v982, 1e-06
      %v1015 = vadd.f32 %v983, 1e-06
      %v1016 = vadd.f32 %v984, 1e-06
      %v1017 = vrsqrt.pop %v985
      %v1018 = vrsqrt.pop %v986
      %v1019 = vrsqrt.pop %v987
      %v1020 = vrsqrt.pop %v988
      %v1021 = vrsqrt.pop %v989
      %v1022 = vrsqrt.pop %v990
      %v1023 = vrsqrt.pop %v991
      %v1024 = vrsqrt.pop %v992
      %v1025 = vrsqrt.pop %v993
      %v1026 = vrsqrt.pop %v994
      %v1027 = vrsqrt.pop %v995
      %v1028 = vrsqrt.pop %v996
      %v1029 = vrsqrt.pop %v997
      %v1030 = vrsqrt.pop %v998
      %v1031 = vrsqrt.pop %v999
      %v1032 = vrsqrt.pop %v1000
      %v1033 = vrsqrt.pop %v1001
      %v1034 = vrsqrt.pop %v1002
      %v1035 = vrsqrt.pop %v1003
      %v1036 = vrsqrt.pop %v1004
      %v1037 = vrsqrt.pop %v1005
      %v1038 = vrsqrt.pop %v1006
      %v1039 = vrsqrt.pop %v1007
      %v1040 = vrsqrt.pop %v1008
      %v1041 = vrsqrt.pop %v1009
      %v1042 = vrsqrt.pop %v1010
      %v1043 = vrsqrt.pop %v1011
      %v1044 = vrsqrt.pop %v1012
      %v1045 = vrsqrt.pop %v1013
      %v1046 = vrsqrt.pop %v1014
      %v1047 = vrsqrt.pop %v1015
      %v1048 = vrsqrt.pop %v1016
      %v1049 = vmul.f32 %v793, %v1017
      %v1050 = vmul.f32 %v794, %v1018
      %v1051 = vmul.f32 %v795, %v1019
      %v1052 = vmul.f32 %v796, %v1020
      %v1053 = vmul.f32 %v797, %v1021
      %v1054 = vmul.f32 %v798, %v1022
      %v1055 = vmul.f32 %v799, %v1023
      %v1056 = vmul.f32 %v800, %v1024
      %v1057 = vmul.f32 %v801, %v1025
      %v1058 = vmul.f32 %v802, %v1026
      %v1059 = vmul.f32 %v803, %v1027
      %v1060 = vmul.f32 %v804, %v1028
      %v1061 = vmul.f32 %v805, %v1029
      %v1062 = vmul.f32 %v806, %v1030
      %v1063 = vmul.f32 %v807, %v1031
      %v1064 = vmul.f32 %v808, %v1032
      %v1065 = vmul.f32 %v809, %v1033
      %v1066 = vmul.f32 %v810, %v1034
      %v1067 = vmul.f32 %v811, %v1035
      %v1068 = vmul.f32 %v812, %v1036
      %v1069 = vmul.f32 %v813, %v1037
      %v1070 = vmul.f32 %v814, %v1038
      %v1071 = vmul.f32 %v815, %v1039
      %v1072 = vmul.f32 %v816, %v1040
      %v1073 = vmul.f32 %v817, %v1041
      %v1074 = vmul.f32 %v818, %v1042
      %v1075 = vmul.f32 %v819, %v1043
      %v1076 = vmul.f32 %v820, %v1044
      %v1077 = vmul.f32 %v821, %v1045
      %v1078 = vmul.f32 %v822, %v1046
      %v1079 = vmul.f32 %v823, %v1047
      %v1080 = vmul.f32 %v824, %v1048
      %v1082 = vlaneseq
      %v1083 = vshrl.u32 %v1082, 7
      %v1084 = vsub.s32 0, %v1083
      %v1085 = vrot.slane %v308, %v1084
      %v1087 = vmul.f32 %v1049, %v1085
      %v1088 = vmul.f32 %v1050, %v1085
      %v1089 = vmul.f32 %v1051, %v1085
      %v1090 = vmul.f32 %v1052, %v1085
      %v1091 = vmul.f32 %v1053, %v1085
      %v1092 = vmul.f32 %v1054, %v1085
      %v1093 = vmul.f32 %v1055, %v1085
      %v1094 = vmul.f32 %v1056, %v1085
      %v1095 = vmul.f32 %v1057, %v1085
      %v1096 = vmul.f32 %v1058, %v1085
      %v1097 = vmul.f32 %v1059, %v1085
      %v1098 = vmul.f32 %v1060, %v1085
      %v1099 = vmul.f32 %v1061, %v1085
      %v1100 = vmul.f32 %v1062, %v1085
      %v1101 = vmul.f32 %v1063, %v1085
      %v1102 = vmul.f32 %v1064, %v1085
      %v1103 = vmul.f32 %v1065, %v1085
      %v1104 = vmul.f32 %v1066, %v1085
      %v1105 = vmul.f32 %v1067, %v1085
      %v1106 = vmul.f32 %v1068, %v1085
      %v1107 = vmul.f32 %v1069, %v1085
      %v1108 = vmul.f32 %v1070, %v1085
      %v1109 = vmul.f32 %v1071, %v1085
      %v1110 = vmul.f32 %v1072, %v1085
      %v1111 = vmul.f32 %v1073, %v1085
      %v1112 = vmul.f32 %v1074, %v1085
      %v1113 = vmul.f32 %v1075, %v1085
      %v1114 = vmul.f32 %v1076, %v1085
      %v1115 = vmul.f32 %v1077, %v1085
      %v1116 = vmul.f32 %v1078, %v1085
      %v1117 = vmul.f32 %v1079, %v1085
      %v1118 = vmul.f32 %v1080, %v1085
      %v1120 = vlaneseq
      %v1121 = vshrl.u32 %v1120, 7
      %v1122 = vsub.s32 0, %v1121
      %v1123 = vrot.slane %v309, %v1122
      %v1125 = vadd.f32 %v1087, %v1123
      %v1126 = vadd.f32 %v1088, %v1123
      %v1127 = vadd.f32 %v1089, %v1123
      %v1128 = vadd.f32 %v1090, %v1123
      %v1129 = vadd.f32 %v1091, %v1123
      %v1130 = vadd.f32 %v1092, %v1123
      %v1131 = vadd.f32 %v1093, %v1123
      %v1132 = vadd.f32 %v1094, %v1123
      %v1133 = vadd.f32 %v1095, %v1123
      %v1134 = vadd.f32 %v1096, %v1123
      %v1135 = vadd.f32 %v1097, %v1123
      %v1136 = vadd.f32 %v1098, %v1123
      %v1137 = vadd.f32 %v1099, %v1123
      %v1138 = vadd.f32 %v1100, %v1123
      %v1139 = vadd.f32 %v1101, %v1123
      %v1140 = vadd.f32 %v1102, %v1123
      %v1141 = vadd.f32 %v1103, %v1123
      %v1142 = vadd.f32 %v1104, %v1123
      %v1143 = vadd.f32 %v1105, %v1123
      %v1144 = vadd.f32 %v1106, %v1123
      %v1145 = vadd.f32 %v1107, %v1123
      %v1146 = vadd.f32 %v1108, %v1123
      %v1147 = vadd.f32 %v1109, %v1123
      %v1148 = vadd.f32 %v1110, %v1123
      %v1149 = vadd.f32 %v1111, %v1123
      %v1150 = vadd.f32 %v1112, %v1123
      %v1151 = vadd.f32 %v1113, %v1123
      %v1152 = vadd.f32 %v1114, %v1123
      %v1153 = vadd.f32 %v1115, %v1123
      %v1154 = vadd.f32 %v1116, %v1123
      %v1155 = vadd.f32 %v1117, %v1123
      %v1156 = vadd.f32 %v1118, %v1123
      %v1157 = vpack.c.bf16 %v1126, %v1125
      %v1158 = vpack.c.bf16 %v1128, %v1127
      %v1159 = vpack.c.bf16 %v1130, %v1129
      %v1160 = vpack.c.bf16 %v1132, %v1131
      %v1161 = vpack.c.bf16 %v1134, %v1133
      %v1162 = vpack.c.bf16 %v1136, %v1135
      %v1163 = vpack.c.bf16 %v1138, %v1137
      %v1164 = vpack.c.bf16 %v1140, %v1139
      %v1165 = vpack.c.bf16 %v1142, %v1141
      %v1166 = vpack.c.bf16 %v1144, %v1143
      %v1167 = vpack.c.bf16 %v1146, %v1145
      %v1168 = vpack.c.bf16 %v1148, %v1147
      %v1169 = vpack.c.bf16 %v1150, %v1149
      %v1170 = vpack.c.bf16 %v1152, %v1151
      %v1171 = vpack.c.bf16 %v1154, %v1153
      %v1172 = vpack.c.bf16 %v1156, %v1155
      %v1189 = vunpack.c.l.b16 %v1157
      %v1190 = vunpack.c.h.b16 %v1157
      %v1191 = vunpack.c.l.b16 %v1158
      %v1192 = vunpack.c.h.b16 %v1158
      %v1193 = vunpack.c.l.b16 %v1159
      %v1194 = vunpack.c.h.b16 %v1159
      %v1195 = vunpack.c.l.b16 %v1160
      %v1196 = vunpack.c.h.b16 %v1160
      %v1197 = vunpack.c.l.b16 %v1161
      %v1198 = vunpack.c.h.b16 %v1161
      %v1199 = vunpack.c.l.b16 %v1162
      %v1200 = vunpack.c.h.b16 %v1162
      %v1201 = vunpack.c.l.b16 %v1163
      %v1202 = vunpack.c.h.b16 %v1163
      %v1203 = vunpack.c.l.b16 %v1164
      %v1204 = vunpack.c.h.b16 %v1164
      %v1205 = vunpack.c.l.b16 %v1165
      %v1206 = vunpack.c.h.b16 %v1165
      %v1207 = vunpack.c.l.b16 %v1166
      %v1208 = vunpack.c.h.b16 %v1166
      %v1209 = vunpack.c.l.b16 %v1167
      %v1210 = vunpack.c.h.b16 %v1167
      %v1211 = vunpack.c.l.b16 %v1168
      %v1212 = vunpack.c.h.b16 %v1168
      %v1213 = vunpack.c.l.b16 %v1169
      %v1214 = vunpack.c.h.b16 %v1169
      %v1215 = vunpack.c.l.b16 %v1170
      %v1216 = vunpack.c.h.b16 %v1170
      %v1217 = vunpack.c.l.b16 %v1171
      %v1218 = vunpack.c.h.b16 %v1171
      %v1219 = vunpack.c.l.b16 %v1172
      %v1220 = vunpack.c.h.b16 %v1172
      %v1221 = vpack.c.b16 %v1189, %v1189
      %v1222 = vpack.c.b16 %v1190, %v1190
      %v1223 = vpack.c.b16 %v1191, %v1191
      %v1224 = vpack.c.b16 %v1192, %v1192
      %v1225 = vpack.c.b16 %v1193, %v1193
      %v1226 = vpack.c.b16 %v1194, %v1194
      %v1227 = vpack.c.b16 %v1195, %v1195
      %v1228 = vpack.c.b16 %v1196, %v1196
      %v1229 = vpack.c.b16 %v1197, %v1197
      %v1230 = vpack.c.b16 %v1198, %v1198
      %v1231 = vpack.c.b16 %v1199, %v1199
      %v1232 = vpack.c.b16 %v1200, %v1200
      %v1233 = vpack.c.b16 %v1201, %v1201
      %v1234 = vpack.c.b16 %v1202, %v1202
      %v1235 = vpack.c.b16 %v1203, %v1203
      %v1236 = vpack.c.b16 %v1204, %v1204
      %v1237 = vpack.c.b16 %v1205, %v1205
      %v1238 = vpack.c.b16 %v1206, %v1206
      %v1239 = vpack.c.b16 %v1207, %v1207
      %v1240 = vpack.c.b16 %v1208, %v1208
      %v1241 = vpack.c.b16 %v1209, %v1209
      %v1242 = vpack.c.b16 %v1210, %v1210
      %v1243 = vpack.c.b16 %v1211, %v1211
      %v1244 = vpack.c.b16 %v1212, %v1212
      %v1245 = vpack.c.b16 %v1213, %v1213
      %v1246 = vpack.c.b16 %v1214, %v1214
      %v1247 = vpack.c.b16 %v1215, %v1215
      %v1248 = vpack.c.b16 %v1216, %v1216
      %v1249 = vpack.c.b16 %v1217, %v1217
      %v1250 = vpack.c.b16 %v1218, %v1218
      %v1251 = vpack.c.b16 %v1219, %v1219
      %v1252 = vpack.c.b16 %v1220, %v1220
      %vm1285 = vcmask 519168
      %1286 = vst.msk [vmem:[%s305] sm:$0xf] %vm1285, %v1221
      %1287 = vst.msk [vmem:[%s305 + $0x4] sm:$0xf] %vm1285, %v1222
      %1288 = vst.msk [vmem:[%s305 + $0x8] sm:$0xf] %vm1285, %v1223
      %1289 = vst.msk [vmem:[%s305 + $0xc] sm:$0xf] %vm1285, %v1224
      %1290 = vst.msk [vmem:[%s305 + $0x10] sm:$0xf] %vm1285, %v1225
      %1291 = vst.msk [vmem:[%s305 + $0x14] sm:$0xf] %vm1285, %v1226
      %1292 = vst.msk [vmem:[%s305 + $0x18] sm:$0xf] %vm1285, %v1227
      %1293 = vst.msk [vmem:[%s305 + $0x1c] sm:$0xf] %vm1285, %v1228
      %1294 = vst.msk [vmem:[%s305 + $0x20] sm:$0xf] %vm1285, %v1229
      %1295 = vst.msk [vmem:[%s305 + $0x24] sm:$0xf] %vm1285, %v1230
      %1296 = vst.msk [vmem:[%s305 + $0x28] sm:$0xf] %vm1285, %v1231
      %1297 = vst.msk [vmem:[%s305 + $0x2c] sm:$0xf] %vm1285, %v1232
      %1298 = vst.msk [vmem:[%s305 + $0x30] sm:$0xf] %vm1285, %v1233
      %1299 = vst.msk [vmem:[%s305 + $0x34] sm:$0xf] %vm1285, %v1234
      %1300 = vst.msk [vmem:[%s305 + $0x38] sm:$0xf] %vm1285, %v1235
      %1301 = vst.msk [vmem:[%s305 + $0x3c] sm:$0xf] %vm1285, %v1236
      %1302 = vst.msk [vmem:[%s305 + $0x40] sm:$0xf] %vm1285, %v1237
      %1303 = vst.msk [vmem:[%s305 + $0x44] sm:$0xf] %vm1285, %v1238
      %1304 = vst.msk [vmem:[%s305 + $0x48] sm:$0xf] %vm1285, %v1239
      %1305 = vst.msk [vmem:[%s305 + $0x4c] sm:$0xf] %vm1285, %v1240
      %1306 = vst.msk [vmem:[%s305 + $0x50] sm:$0xf] %vm1285, %v1241
      %1307 = vst.msk [vmem:[%s305 + $0x54] sm:$0xf] %vm1285, %v1242
      %1308 = vst.msk [vmem:[%s305 + $0x58] sm:$0xf] %vm1285, %v1243
      %1309 = vst.msk [vmem:[%s305 + $0x5c] sm:$0xf] %vm1285, %v1244
      %1310 = vst.msk [vmem:[%s305 + $0x60] sm:$0xf] %vm1285, %v1245
      %1311 = vst.msk [vmem:[%s305 + $0x64] sm:$0xf] %vm1285, %v1246
      %1312 = vst.msk [vmem:[%s305 + $0x68] sm:$0xf] %vm1285, %v1247
      %1313 = vst.msk [vmem:[%s305 + $0x6c] sm:$0xf] %vm1285, %v1248
      %1314 = vst.msk [vmem:[%s305 + $0x70] sm:$0xf] %vm1285, %v1249
      %1315 = vst.msk [vmem:[%s305 + $0x74] sm:$0xf] %vm1285, %v1250
      %1316 = vst.msk [vmem:[%s305 + $0x78] sm:$0xf] %vm1285, %v1251
      %1317 = vst.msk [vmem:[%s305 + $0x7c] sm:$0xf] %vm1285, %v1252
      %s1318 = smul.u32 32, %s20
      %p1319 = scmp.lt.s32.totalorder %s1318, 63
      %s1320 = scalar_select %p1319, %s1318, 63
      %p1321 = scmp.lt.s32.totalorder %s21, 0
      %s1322 = scalar_select %p1321, %s21, 0
      %s1323 = sadd.s32 %s1322, %s1320
      %s1324 = smul.addr %s1323, 4
      %s1325 = scalar_lea.vmem %s5, %s1324
      // Predicated region
      $region41: #{tpu_custom_call.1} parent=39 // pred_check
        %p1326 = pneg %p178
      $region42: #{tpu_custom_call.1} parent=39 // pred_check_branch
        %1328 = sbr.rel (%p1326) target = $region44
      $region43: #{tpu_custom_call.1} parent=39 // pred_region
        %s1329 = smul.u32 32, %s20
      $region44: #{tpu_custom_call.1} parent=39 // pred_fallthru
        _
    $region40: #{tpu_custom_call.1} parent=5 // pred_fallthru
      _
    %p1330 = scmp.le.s32.totalorder 2, %s11
    // Predicated region
    $region45: #{tpu_custom_call.1} parent=5 // pred_check
      %p1331 = pneg %p1330
    $region46: #{tpu_custom_call.1} parent=5 // pred_check_branch
      %1333 = sbr.rel (%p1331) target = $region48
    $region47: #{tpu_custom_call.1} parent=5 // pred_region
      %s1334 = ssub.s32 %s11, 2
      // Predicated region
      $region49: #{tpu_custom_call.1} parent=47 // pred_check
        %p1335 = pneg %p184
      $region50: #{tpu_custom_call.1} parent=47 // pred_check_branch
        %1337 = sbr.rel (%p1335) target = $region52
      $region51: #{tpu_custom_call.1} parent=47 // pred_region
        %s1338 = smul.u32 32, %s22
        %p1339 = scmp.lt.s32.totalorder %s1338, 63
        %s1340 = scalar_select %p1339, %s1338, 63
        %p1341 = scmp.lt.s32.totalorder %s23, 0
        %s1342 = scalar_select %p1341, %s23, 0
        %s1343 = sadd.s32 %s1342, %s1340
        %s1344 = smul.addr %s1343, 4
        %s1345 = scalar_lea.vmem %s5, %s1344
      $region52: #{tpu_custom_call.1} parent=47 // pred_fallthru
        _
    $region48: #{tpu_custom_call.1} parent=5 // pred_fallthru
      _
  $region6: #{tpu_custom_call.1} parent=0 // loop_footer
    %s15 = sadd.s32 1, %s11
  $region7: #{tpu_custom_call.1} parent=0 // loop_footer_branch
    %10 = sbr.rel target = $region3
  $region8: #{tpu_custom_call.1} parent=0 // loop_exit
    _

</llo_original>
